<compile_context>
chip_gen: v7x
topology: tpu7x:2x2x1
jax: 0.10.0
libtpu: 0.0.40
codegen_flags: <defaults>
</compile_context>

<pallas_src>
import functools

import jax
import jax.numpy as jnp
from jax.experimental import pallas as pl
from jax.experimental.pallas import tpu as pltpu


_LANE = 128          # lane width: pad every feature dim to a multiple of this
_BF16_SUBLANE = 16   # bf16 minimum sublane tile


def _round_up(x, m):
    return ((x + m - 1) // m) * m


# ----------------------------------------------------------------------------
# Kernel
# ----------------------------------------------------------------------------
def _make_mlp_kernel(relu_flags):
    """Build a fused MLP kernel.

    Kernel ref order: (x, w0, b0, w1, b1, ..., out).
    relu_flags[i] == True -> apply ReLU after layer i (dropout is identity).

    Activations arrive as bf16; each matmul accumulates in f32
    (preferred_element_type); bias add + ReLU run on the f32 accumulator;
    the activation is re-cast to bf16 before the next matmul and for the
    final lane-dense bf16 output store.
    """
    n_layers = len(relu_flags)

    def kernel(*refs):
        x_ref = refs[0]
        o_ref = refs[-1]
        h = x_ref[...]                                 # bf16 (tile, in_pad)
        for i in range(n_layers):
            w = refs[1 + 2 * i][...]                   # bf16 (in_pad, out_pad)
            b = refs[2 + 2 * i][...]                   # f32  (1, out_pad)
            acc = jnp.dot(h, w, preferred_element_type=jnp.float32) + b
            if relu_flags[i]:
                acc = jnp.maximum(acc, 0.0)
            h = acc.astype(jnp.bfloat16) if i < n_layers - 1 else acc
        o_ref[...] = h.astype(o_ref.dtype)             # bf16 unmasked vst

    return kernel


# ----------------------------------------------------------------------------
# One-time parameter preparation (hoisted out of the forward pass)
# ----------------------------------------------------------------------------
def prepare_padded_params(params):
    """Zero-pad feature dims to multiples of 128 and cast weights to bf16, once.

    params: list of (w, b) with w: (in, out), b: (1, out), f32.
    Returns (flat_params=[w0,b0,w1,b1,...], padded_dims).

    Zero-padded weight rows/cols + zero bias lanes keep padded lanes at
    exactly 0 through every layer (ReLU(0)=0), so results are unchanged.
    """
    dims = [params[0][0].shape[0]] + [w.shape[1] for (w, _) in params]
    pdims = [_round_up(d, _LANE) for d in dims]

    flat = []
    for li, (w, b) in enumerate(params):
        pin, pout = pdims[li], pdims[li + 1]
        wp = jnp.zeros((pin, pout), jnp.bfloat16)
        wp = wp.at[: w.shape[0], : w.shape[1]].set(w.astype(jnp.bfloat16))
        bp = jnp.zeros((1, pout), jnp.float32)
        bp = bp.at[:, : b.shape[1]].set(b.astype(jnp.float32))
        flat.extend([wp, bp])
    return flat, pdims


def _choose_batch_tile(B, batch_tile):
    """Pick a bf16-friendly batch tile and padded batch size.

    - multiple of 16 (bf16 sublane packing; (8,128) bf16 is half a vreg)
    - capped at batch_tile
    - if the grid would collapse to a single step and B allows it, split in
      two so the v7x megacore ("parallel" batch axis) can use both TCs.
    """
    tile = min(batch_tile, _round_up(B, _BF16_SUBLANE))
    tile = max(_BF16_SUBLANE, _round_up(tile, _BF16_SUBLANE))
    Bp = _round_up(B, tile)
    if Bp // tile < 2 and B >= 2 * _BF16_SUBLANE:
        tile = _round_up(-(-B // 2), _BF16_SUBLANE)
        Bp = _round_up(B, tile)
    return tile, Bp


# ----------------------------------------------------------------------------
# Forward builder
# ----------------------------------------------------------------------------
def build_encoder_decoder_forward(params, relu_flags, *, batch_tile=1024,
                                  out_dtype=jnp.float32):
    """Pad/cast parameters once and return a jitted forward(x) callable."""
    flat_params, pdims = prepare_padded_params(params)
    in_dim = params[0][0].shape[0]
    out_dim = params[-1][0].shape[1]
    param_shapes = [p.shape for p in flat_params]
    kernel = _make_mlp_kernel(tuple(relu_flags))

    def _forward_impl(x, flat_p, weight_buffers):
        B = x.shape[0]
        tile, Bp = _choose_batch_tile(B, batch_tile)

        # Pad-in (fused by XLA with the surrounding jit, not a standalone copy).
        xp = jnp.pad(x.astype(jnp.bfloat16),
                     ((0, Bp - B), (0, pdims[0] - in_dim)))

        # Resident weights/biases: constant index_map, single-buffered.
        spec_kwargs = ({} if weight_buffers is None
                       else dict(pipeline_mode=pl.Buffered(weight_buffers)))
        in_specs = [pl.BlockSpec((tile, pdims[0]), lambda i: (i, 0))]
        for shp in param_shapes:
            in_specs.append(pl.BlockSpec(shp, lambda i: (0, 0), **spec_kwargs))
        out_spec = pl.BlockSpec((tile, pdims[-1]), lambda i: (i, 0))

        fn = pl.pallas_call(
            kernel,
            out_shape=jax.ShapeDtypeStruct((Bp, pdims[-1]), jnp.bfloat16),
            grid_spec=pltpu.PrefetchScalarGridSpec(
                num_scalar_prefetch=0,
                grid=(Bp // tile,),
                in_specs=in_specs,
                out_specs=out_spec,
            ),
            compiler_params=pltpu.CompilerParams(
                dimension_semantics=("parallel",),
            ),
        )
        out_padded = fn(xp, *flat_p)
        # Slice-out + upcast fused in the same jit as the kernel call.
        return out_padded[:B, :out_dim].astype(out_dtype)

    fwd_single = jax.jit(functools.partial(_forward_impl, weight_buffers=1))
    fwd_double = jax.jit(functools.partial(_forward_impl, weight_buffers=None))

    cache = {}

    def forward(x):
        key = (x.shape, x.dtype)
        f = cache.get(key)
        if f is not None:
            return f(x, flat_params)
        try:
            out = jax.block_until_ready(fwd_single(x, flat_params))
            cache[key] = fwd_single
            return out
        except Exception:
            # Fallback: default (double) buffering for weights if Buffered(1)
            # is rejected by this jax/Mosaic version.
            out = jax.block_until_ready(fwd_double(x, flat_params))
            cache[key] = fwd_double
            return out

    return forward


# ----------------------------------------------------------------------------
# Reference + init
# ----------------------------------------------------------------------------
def init_linear_params(key, layer_specs):
    """Deterministic init mimicking nn.Linear default (uniform +-1/sqrt(fan_in)).

    Returns list of (w_T, b) with w_T: (in, out), b: (1, out), all f32.
    """
    params = []
    for (fan_in, fan_out) in layer_specs:
        key, kw, kb = jax.random.split(key, 3)
        bound = 1.0 / jnp.sqrt(jnp.float32(fan_in))
        w = jax.random.uniform(kw, (fan_in, fan_out), jnp.float32, -bound, bound)
        b = jax.random.uniform(kb, (1, fan_out), jnp.float32, -bound, bound)
        params.append((w, b))
    return params, key


def reference_forward(x, params, relu_flags):
    h = x
    for (w, b), relu in zip(params, relu_flags):
        h = h @ w + b
        if relu:
            h = jnp.maximum(h, 0.0)
    return h


if __name__ == "__main__":
    # Small, self-consistent architecture:
    #   encoder: 32 -> 64 -> 16   (ReLU+Dropout between layers)
    #   decoder: 16 -> 64 -> 32   (ReLU+Dropout between layers)
    encoder_layers = [(32, 64), (64, 16)]
    decoder_layers = [(16, 64), (64, 32)]
    dropout_rate = 0.1  # identity in eval mode

    all_specs = encoder_layers + decoder_layers
    # ReLU after every layer except the last of each sub-network.
    relu_flags = (
        [i < len(encoder_layers) - 1 for i in range(len(encoder_layers))]
        + [i < len(decoder_layers) - 1 for i in range(len(decoder_layers))]
    )

    key = jax.random.PRNGKey(0)
    params, key = init_linear_params(key, all_specs)

    key, kx = jax.random.split(key)
    batch = 64
    x = jax.random.normal(kx, (batch, encoder_layers[0][0]), jnp.float32)

    forward = build_encoder_decoder_forward(params, relu_flags, batch_tile=1024)
    out = forward(x)                 # B=64 -> tile=32, grid=2 (both v7x TCs)
    out = jax.block_until_ready(out)

    ref = reference_forward(x, params, relu_flags)
    # bf16 matmul inputs + bf16 output store with f32 accumulation -> widened tolerance.
    if not jnp.allclose(out, ref, atol=5e-2, rtol=5e-2):
        max_err = float(jnp.max(jnp.abs(out - ref)))
        raise AssertionError(
            f"Pallas kernel output mismatch vs reference (max_err={max_err})")

    print("KERNEL_OK")
</pallas_src>

<mosaic_0001>
module attributes {stable_mosaic.version = 11 : i64} {
  func.func @kernel(%arg0: i32, %arg1: memref<32x128xbf16, #tpu.memory_space<vmem>>, %arg2: memref<128x128xbf16, #tpu.memory_space<vmem>>, %arg3: memref<1x128xf32, #tpu.memory_space<vmem>>, %arg4: memref<128x128xbf16, #tpu.memory_space<vmem>>, %arg5: memref<1x128xf32, #tpu.memory_space<vmem>>, %arg6: memref<128x128xbf16, #tpu.memory_space<vmem>>, %arg7: memref<1x128xf32, #tpu.memory_space<vmem>>, %arg8: memref<128x128xbf16, #tpu.memory_space<vmem>>, %arg9: memref<1x128xf32, #tpu.memory_space<vmem>>, %arg10: memref<32x128xbf16, #tpu.memory_space<vmem>>) attributes {dimension_semantics = [#tpu.dimension_semantics<parallel>], iteration_bounds = array<i64: 2>, scalar_prefetch = 0 : i64, scratch_operands = 0 : i64, tpu.core_type = #tpu.core_type<tc>, window_params = [{transform_indices = @transform_0, window_bounds = array<i64: 32, 128>}, {pipeline_mode = #tpu.pipeline_mode<synchronous>, transform_indices = @transform_1, window_bounds = array<i64: 128, 128>}, {pipeline_mode = #tpu.pipeline_mode<synchronous>, transform_indices = @transform_2, window_bounds = array<i64: 1, 128>}, {pipeline_mode = #tpu.pipeline_mode<synchronous>, transform_indices = @transform_3, window_bounds = array<i64: 128, 128>}, {pipeline_mode = #tpu.pipeline_mode<synchronous>, transform_indices = @transform_4, window_bounds = array<i64: 1, 128>}, {pipeline_mode = #tpu.pipeline_mode<synchronous>, transform_indices = @transform_5, window_bounds = array<i64: 128, 128>}, {pipeline_mode = #tpu.pipeline_mode<synchronous>, transform_indices = @transform_6, window_bounds = array<i64: 1, 128>}, {pipeline_mode = #tpu.pipeline_mode<synchronous>, transform_indices = @transform_7, window_bounds = array<i64: 128, 128>}, {pipeline_mode = #tpu.pipeline_mode<synchronous>, transform_indices = @transform_8, window_bounds = array<i64: 1, 128>}, {transform_indices = @transform_9, window_bounds = array<i64: 32, 128>}]} {
    %c0 = arith.constant 0 : index
    %c0_0 = arith.constant 0 : index
    %0 = vector.load %arg1[%c0, %c0_0] : memref<32x128xbf16, #tpu.memory_space<vmem>>, vector<32x128xbf16>
    %c0_1 = arith.constant 0 : index
    %c0_2 = arith.constant 0 : index
    %1 = vector.load %arg2[%c0_1, %c0_2] : memref<128x128xbf16, #tpu.memory_space<vmem>>, vector<128x128xbf16>
    %c0_3 = arith.constant 0 : index
    %c0_4 = arith.constant 0 : index
    %2 = vector.load %arg3[%c0_3, %c0_4] : memref<1x128xf32, #tpu.memory_space<vmem>>, vector<1x128xf32>
    %cst = arith.constant dense<0.000000e+00> : vector<32x128xf32>
    %3 = tpu.matmul %0, %1, %cst {dimension_numbers = #tpu.dot_dimension_numbers<[1], [0], [0], [1], [0, 0, 1, 1], [], []>} : vector<32x128xbf16>, vector<128x128xbf16>, vector<32x128xf32> -> vector<32x128xf32>
    %4 = vector.broadcast %2 : vector<1x128xf32> to vector<32x128xf32>
    %5 = arith.addf %3, %4 : vector<32x128xf32>
    %cst_5 = arith.constant 0.000000e+00 : f32
    %6 = vector.broadcast %cst_5 : f32 to vector<32x128xf32>
    %7 = arith.maximumf %5, %6 : vector<32x128xf32>
    %8 = arith.truncf %7 : vector<32x128xf32> to vector<32x128xbf16>
    %c0_6 = arith.constant 0 : index
    %c0_7 = arith.constant 0 : index
    %9 = vector.load %arg4[%c0_6, %c0_7] : memref<128x128xbf16, #tpu.memory_space<vmem>>, vector<128x128xbf16>
    %c0_8 = arith.constant 0 : index
    %c0_9 = arith.constant 0 : index
    %10 = vector.load %arg5[%c0_8, %c0_9] : memref<1x128xf32, #tpu.memory_space<vmem>>, vector<1x128xf32>
    %cst_10 = arith.constant dense<0.000000e+00> : vector<32x128xf32>
    %11 = tpu.matmul %8, %9, %cst_10 {dimension_numbers = #tpu.dot_dimension_numbers<[1], [0], [0], [1], [0, 0, 1, 1], [], []>} : vector<32x128xbf16>, vector<128x128xbf16>, vector<32x128xf32> -> vector<32x128xf32>
    %12 = vector.broadcast %10 : vector<1x128xf32> to vector<32x128xf32>
    %13 = arith.addf %11, %12 : vector<32x128xf32>
    %14 = arith.truncf %13 : vector<32x128xf32> to vector<32x128xbf16>
    %c0_11 = arith.constant 0 : index
    %c0_12 = arith.constant 0 : index
    %15 = vector.load %arg6[%c0_11, %c0_12] : memref<128x128xbf16, #tpu.memory_space<vmem>>, vector<128x128xbf16>
    %c0_13 = arith.constant 0 : index
    %c0_14 = arith.constant 0 : index
    %16 = vector.load %arg7[%c0_13, %c0_14] : memref<1x128xf32, #tpu.memory_space<vmem>>, vector<1x128xf32>
    %cst_15 = arith.constant dense<0.000000e+00> : vector<32x128xf32>
    %17 = tpu.matmul %14, %15, %cst_15 {dimension_numbers = #tpu.dot_dimension_numbers<[1], [0], [0], [1], [0, 0, 1, 1], [], []>} : vector<32x128xbf16>, vector<128x128xbf16>, vector<32x128xf32> -> vector<32x128xf32>
    %18 = vector.broadcast %16 : vector<1x128xf32> to vector<32x128xf32>
    %19 = arith.addf %17, %18 : vector<32x128xf32>
    %cst_16 = arith.constant 0.000000e+00 : f32
    %20 = vector.broadcast %cst_16 : f32 to vector<32x128xf32>
    %21 = arith.maximumf %19, %20 : vector<32x128xf32>
    %22 = arith.truncf %21 : vector<32x128xf32> to vector<32x128xbf16>
    %c0_17 = arith.constant 0 : index
    %c0_18 = arith.constant 0 : index
    %23 = vector.load %arg8[%c0_17, %c0_18] : memref<128x128xbf16, #tpu.memory_space<vmem>>, vector<128x128xbf16>
    %c0_19 = arith.constant 0 : index
    %c0_20 = arith.constant 0 : index
    %24 = vector.load %arg9[%c0_19, %c0_20] : memref<1x128xf32, #tpu.memory_space<vmem>>, vector<1x128xf32>
    %cst_21 = arith.constant dense<0.000000e+00> : vector<32x128xf32>
    %25 = tpu.matmul %22, %23, %cst_21 {dimension_numbers = #tpu.dot_dimension_numbers<[1], [0], [0], [1], [0, 0, 1, 1], [], []>} : vector<32x128xbf16>, vector<128x128xbf16>, vector<32x128xf32> -> vector<32x128xf32>
    %26 = vector.broadcast %24 : vector<1x128xf32> to vector<32x128xf32>
    %27 = arith.addf %25, %26 : vector<32x128xf32>
    %28 = arith.truncf %27 : vector<32x128xf32> to vector<32x128xbf16>
    %c0_22 = arith.constant 0 : index
    %c0_23 = arith.constant 0 : index
    %29 = vector.load %arg10[%c0_22, %c0_23] : memref<32x128xbf16, #tpu.memory_space<vmem>>, vector<32x128xbf16>
    tpu.vector_store %arg10[%c0_22, %c0_23], %28 {strides = array<i32>} : memref<32x128xbf16, #tpu.memory_space<vmem>>, vector<32x128xbf16>,
    return
  }
  func.func @transform_0(%arg0: i32) -> (i32, i32) {
    %c0_i32 = arith.constant 0 : i32
    %c0_i32_0 = arith.constant 0 : i32
    return %arg0, %c0_i32 : i32, i32
  }
  func.func @transform_1(%arg0: i32) -> (i32, i32) {
    %c0_i32 = arith.constant 0 : i32
    %c0_i32_0 = arith.constant 0 : i32
    %c0_i32_1 = arith.constant 0 : i32
    return %c0_i32, %c0_i32_0 : i32, i32
  }
  func.func @transform_2(%arg0: i32) -> (i32, i32) {
    %c0_i32 = arith.constant 0 : i32
    %c0_i32_0 = arith.constant 0 : i32
    %c0_i32_1 = arith.constant 0 : i32
    return %c0_i32, %c0_i32_0 : i32, i32
  }
  func.func @transform_3(%arg0: i32) -> (i32, i32) {
    %c0_i32 = arith.constant 0 : i32
    %c0_i32_0 = arith.constant 0 : i32
    %c0_i32_1 = arith.constant 0 : i32
    return %c0_i32, %c0_i32_0 : i32, i32
  }
  func.func @transform_4(%arg0: i32) -> (i32, i32) {
    %c0_i32 = arith.constant 0 : i32
    %c0_i32_0 = arith.constant 0 : i32
    %c0_i32_1 = arith.constant 0 : i32
    return %c0_i32, %c0_i32_0 : i32, i32
  }
  func.func @transform_5(%arg0: i32) -> (i32, i32) {
    %c0_i32 = arith.constant 0 : i32
    %c0_i32_0 = arith.constant 0 : i32
    %c0_i32_1 = arith.constant 0 : i32
    return %c0_i32, %c0_i32_0 : i32, i32
  }
  func.func @transform_6(%arg0: i32) -> (i32, i32) {
    %c0_i32 = arith.constant 0 : i32
    %c0_i32_0 = arith.constant 0 : i32
    %c0_i32_1 = arith.constant 0 : i32
    return %c0_i32, %c0_i32_0 : i32, i32
  }
  func.func @transform_7(%arg0: i32) -> (i32, i32) {
    %c0_i32 = arith.constant 0 : i32
    %c0_i32_0 = arith.constant 0 : i32
    %c0_i32_1 = arith.constant 0 : i32
    return %c0_i32, %c0_i32_0 : i32, i32
  }
  func.func @transform_8(%arg0: i32) -> (i32, i32) {
    %c0_i32 = arith.constant 0 : i32
    %c0_i32_0 = arith.constant 0 : i32
    %c0_i32_1 = arith.constant 0 : i32
    return %c0_i32, %c0_i32_0 : i32, i32
  }
  func.func @transform_9(%arg0: i32) -> (i32, i32) {
    %c0_i32 = arith.constant 0 : i32
    %c0_i32_0 = arith.constant 0 : i32
    return %arg0, %c0_i32 : i32, i32
  }
}

module attributes {stable_mosaic.version = 11 : i64} {
  func.func @kernel(%arg0: i32, %arg1: memref<32x128xbf16, #tpu.memory_space<vmem>>, %arg2: memref<128x128xbf16, #tpu.memory_space<vmem>>, %arg3: memref<1x128xf32, #tpu.memory_space<vmem>>, %arg4: memref<128x128xbf16, #tpu.memory_space<vmem>>, %arg5: memref<1x128xf32, #tpu.memory_space<vmem>>, %arg6: memref<128x128xbf16, #tpu.memory_space<vmem>>, %arg7: memref<1x128xf32, #tpu.memory_space<vmem>>, %arg8: memref<128x128xbf16, #tpu.memory_space<vmem>>, %arg9: memref<1x128xf32, #tpu.memory_space<vmem>>, %arg10: memref<32x128xbf16, #tpu.memory_space<vmem>>) attributes {dimension_semantics = [#tpu.dimension_semantics<parallel>], iteration_bounds = array<i64: 2>, scalar_prefetch = 0 : i64, scratch_operands = 0 : i64, tpu.core_type = #tpu.core_type<tc>, window_params = [{transform_indices = @transform_0, window_bounds = array<i64: 32, 128>}, {pipeline_mode = #tpu.pipeline_mode<synchronous>, transform_indices = @transform_1, window_bounds = array<i64: 128, 128>}, {pipeline_mode = #tpu.pipeline_mode<synchronous>, transform_indices = @transform_2, window_bounds = array<i64: 1, 128>}, {pipeline_mode = #tpu.pipeline_mode<synchronous>, transform_indices = @transform_3, window_bounds = array<i64: 128, 128>}, {pipeline_mode = #tpu.pipeline_mode<synchronous>, transform_indices = @transform_4, window_bounds = array<i64: 1, 128>}, {pipeline_mode = #tpu.pipeline_mode<synchronous>, transform_indices = @transform_5, window_bounds = array<i64: 128, 128>}, {pipeline_mode = #tpu.pipeline_mode<synchronous>, transform_indices = @transform_6, window_bounds = array<i64: 1, 128>}, {pipeline_mode = #tpu.pipeline_mode<synchronous>, transform_indices = @transform_7, window_bounds = array<i64: 128, 128>}, {pipeline_mode = #tpu.pipeline_mode<synchronous>, transform_indices = @transform_8, window_bounds = array<i64: 1, 128>}, {transform_indices = @transform_9, window_bounds = array<i64: 32, 128>}]} {
    %c0 = arith.constant 0 : index
    %c0_0 = arith.constant 0 : index
    %0 = vector.load %arg1[%c0, %c0_0] : memref<32x128xbf16, #tpu.memory_space<vmem>>, vector<32x128xbf16>
    %c0_1 = arith.constant 0 : index
    %c0_2 = arith.constant 0 : index
    %1 = vector.load %arg2[%c0_1, %c0_2] : memref<128x128xbf16, #tpu.memory_space<vmem>>, vector<128x128xbf16>
    %c0_3 = arith.constant 0 : index
    %c0_4 = arith.constant 0 : index
    %2 = vector.load %arg3[%c0_3, %c0_4] : memref<1x128xf32, #tpu.memory_space<vmem>>, vector<1x128xf32>
    %cst = arith.constant dense<0.000000e+00> : vector<32x128xf32>
    %3 = tpu.matmul %0, %1, %cst {dimension_numbers = #tpu.dot_dimension_numbers<[1], [0], [0], [1], [0, 0, 1, 1], [], []>} : vector<32x128xbf16>, vector<128x128xbf16>, vector<32x128xf32> -> vector<32x128xf32>
    %4 = vector.broadcast %2 : vector<1x128xf32> to vector<32x128xf32>
    %5 = arith.addf %3, %4 : vector<32x128xf32>
    %cst_5 = arith.constant 0.000000e+00 : f32
    %6 = vector.broadcast %cst_5 : f32 to vector<32x128xf32>
    %7 = arith.maximumf %5, %6 : vector<32x128xf32>
    %8 = arith.truncf %7 : vector<32x128xf32> to vector<32x128xbf16>
    %c0_6 = arith.constant 0 : index
    %c0_7 = arith.constant 0 : index
    %9 = vector.load %arg4[%c0_6, %c0_7] : memref<128x128xbf16, #tpu.memory_space<vmem>>, vector<128x128xbf16>
    %c0_8 = arith.constant 0 : index
    %c0_9 = arith.constant 0 : index
    %10 = vector.load %arg5[%c0_8, %c0_9] : memref<1x128xf32, #tpu.memory_space<vmem>>, vector<1x128xf32>
    %cst_10 = arith.constant dense<0.000000e+00> : vector<32x128xf32>
    %11 = tpu.matmul %8, %9, %cst_10 {dimension_numbers = #tpu.dot_dimension_numbers<[1], [0], [0], [1], [0, 0, 1, 1], [], []>} : vector<32x128xbf16>, vector<128x128xbf16>, vector<32x128xf32> -> vector<32x128xf32>
    %12 = vector.broadcast %10 : vector<1x128xf32> to vector<32x128xf32>
    %13 = arith.addf %11, %12 : vector<32x128xf32>
    %14 = arith.truncf %13 : vector<32x128xf32> to vector<32x128xbf16>
    %c0_11 = arith.constant 0 : index
    %c0_12 = arith.constant 0 : index
    %15 = vector.load %arg6[%c0_11, %c0_12] : memref<128x128xbf16, #tpu.memory_space<vmem>>, vector<128x128xbf16>
    %c0_13 = arith.constant 0 : index
    %c0_14 = arith.constant 0 : index
    %16 = vector.load %arg7[%c0_13, %c0_14] : memref<1x128xf32, #tpu.memory_space<vmem>>, vector<1x128xf32>
    %cst_15 = arith.constant dense<0.000000e+00> : vector<32x128xf32>
    %17 = tpu.matmul %14, %15, %cst_15 {dimension_numbers = #tpu.dot_dimension_numbers<[1], [0], [0], [1], [0, 0, 1, 1], [], []>} : vector<32x128xbf16>, vector<128x128xbf16>, vector<32x128xf32> -> vector<32x128xf32>
    %18 = vector.broadcast %16 : vector<1x128xf32> to vector<32x128xf32>
    %19 = arith.addf %17, %18 : vector<32x128xf32>
    %cst_16 = arith.constant 0.000000e+00 : f32
    %20 = vector.broadcast %cst_16 : f32 to vector<32x128xf32>
    %21 = arith.maximumf %19, %20 : vector<32x128xf32>
    %22 = arith.truncf %21 : vector<32x128xf32> to vector<32x128xbf16>
    %c0_17 = arith.constant 0 : index
    %c0_18 = arith.constant 0 : index
    %23 = vector.load %arg8[%c0_17, %c0_18] : memref<128x128xbf16, #tpu.memory_space<vmem>>, vector<128x128xbf16>
    %c0_19 = arith.constant 0 : index
    %c0_20 = arith.constant 0 : index
    %24 = vector.load %arg9[%c0_19, %c0_20] : memref<1x128xf32, #tpu.memory_space<vmem>>, vector<1x128xf32>
    %cst_21 = arith.constant dense<0.000000e+00> : vector<32x128xf32>
    %25 = tpu.matmul %22, %23, %cst_21 {dimension_numbers = #tpu.dot_dimension_numbers<[1], [0], [0], [1], [0, 0, 1, 1], [], []>} : vector<32x128xbf16>, vector<128x128xbf16>, vector<32x128xf32> -> vector<32x128xf32>
    %26 = vector.broadcast %24 : vector<1x128xf32> to vector<32x128xf32>
    %27 = arith.addf %25, %26 : vector<32x128xf32>
    %28 = arith.truncf %27 : vector<32x128xf32> to vector<32x128xbf16>
    %c0_22 = arith.constant 0 : index
    %c0_23 = arith.constant 0 : index
    %29 = vector.load %arg10[%c0_22, %c0_23] : memref<32x128xbf16, #tpu.memory_space<vmem>>, vector<32x128xbf16>
    tpu.vector_store %arg10[%c0_22, %c0_23], %28 {strides = array<i32>} : memref<32x128xbf16, #tpu.memory_space<vmem>>, vector<32x128xbf16>,
    return
  }
  func.func @transform_0(%arg0: i32) -> (i32, i32) {
    %c0_i32 = arith.constant 0 : i32
    %c0_i32_0 = arith.constant 0 : i32
    return %arg0, %c0_i32 : i32, i32
  }
  func.func @transform_1(%arg0: i32) -> (i32, i32) {
    %c0_i32 = arith.constant 0 : i32
    %c0_i32_0 = arith.constant 0 : i32
    %c0_i32_1 = arith.constant 0 : i32
    return %c0_i32, %c0_i32_0 : i32, i32
  }
  func.func @transform_2(%arg0: i32) -> (i32, i32) {
    %c0_i32 = arith.constant 0 : i32
    %c0_i32_0 = arith.constant 0 : i32
    %c0_i32_1 = arith.constant 0 : i32
    return %c0_i32, %c0_i32_0 : i32, i32
  }
  func.func @transform_3(%arg0: i32) -> (i32, i32) {
    %c0_i32 = arith.constant 0 : i32
    %c0_i32_0 = arith.constant 0 : i32
    %c0_i32_1 = arith.constant 0 : i32
    return %c0_i32, %c0_i32_0 : i32, i32
  }
  func.func @transform_4(%arg0: i32) -> (i32, i32) {
    %c0_i32 = arith.constant 0 : i32
    %c0_i32_0 = arith.constant 0 : i32
    %c0_i32_1 = arith.constant 0 : i32
    return %c0_i32, %c0_i32_0 : i32, i32
  }
  func.func @transform_5(%arg0: i32) -> (i32, i32) {
    %c0_i32 = arith.constant 0 : i32
    %c0_i32_0 = arith.constant 0 : i32
    %c0_i32_1 = arith.constant 0 : i32
    return %c0_i32, %c0_i32_0 : i32, i32
  }
  func.func @transform_6(%arg0: i32) -> (i32, i32) {
    %c0_i32 = arith.constant 0 : i32
    %c0_i32_0 = arith.constant 0 : i32
    %c0_i32_1 = arith.constant 0 : i32
    return %c0_i32, %c0_i32_0 : i32, i32
  }
  func.func @transform_7(%arg0: i32) -> (i32, i32) {
    %c0_i32 = arith.constant 0 : i32
    %c0_i32_0 = arith.constant 0 : i32
    %c0_i32_1 = arith.constant 0 : i32
    return %c0_i32, %c0_i32_0 : i32, i32
  }
  func.func @transform_8(%arg0: i32) -> (i32, i32) {
    %c0_i32 = arith.constant 0 : i32
    %c0_i32_0 = arith.constant 0 : i32
    %c0_i32_1 = arith.constant 0 : i32
    return %c0_i32, %c0_i32_0 : i32, i32
  }
  func.func @transform_9(%arg0: i32) -> (i32, i32) {
    %c0_i32 = arith.constant 0 : i32
    %c0_i32_0 = arith.constant 0 : i32
    return %arg0, %c0_i32 : i32, i32
  }
}

</mosaic_0001>

<llo_original>
// kernel: _forward_impl.1
$region0: #{_forward_impl.1}
  #allocation0 [shape = 'u32[]', space=smem, size = 0x4, offset = 0x4, fixed_abs, tag = 'smem constant byte address 0x4 - core index']
  #allocation1 [shape = 'u32[144,128]{1,0:T(1,128)}', space=vmem, size = 0x12000, scoped, tag = 'internal scratch']
  %s0 = inlined_call_operand.vmem [shape: bf16[64,128], index: 0, kind: input, shape index: {}]
  %s1 = inlined_call_operand.vmem [shape: bf16[128,128], index: 1, kind: input, shape index: {}]
  %s2 = inlined_call_operand.vmem [shape: f32[1,128], index: 2, kind: input, shape index: {}]
  %s3 = inlined_call_operand.vmem [shape: bf16[128,128], index: 3, kind: input, shape index: {}]
  %s4 = inlined_call_operand.vmem [shape: f32[1,128], index: 4, kind: input, shape index: {}]
  %s5 = inlined_call_operand.hbm [shape: bf16[128,128], index: 5, kind: input, shape index: {}]
  %s6 = inlined_call_operand.vmem [shape: f32[1,128], index: 6, kind: input, shape index: {}]
  %s7 = inlined_call_operand.hbm [shape: bf16[128,128], index: 7, kind: input, shape index: {}]
  %s8 = inlined_call_operand.vmem [shape: f32[1,128], index: 8, kind: input, shape index: {}]
  %s9 = inlined_call_operand.vmem [shape: bf16[64,128], index: 9, kind: output, shape index: {}]
  %s10 = sld [smem:[#allocation0]]
  $region77: #{_forward_impl.1} parent=0
    _
  %s12 = ssub.s32 1, %s10
  %s13 = scalar_select 0, %s12, %s10
  $region1: #{_forward_impl.1} parent=0
    #allocation2 [shape = 'u8[32768]{0}', space=vmem, size = 0x8000, scoped, tag = 'input window, operand 5, single buffered']
    #allocation3 [shape = 's32[2]{0}', space=sflag, size = 0x8, scoped, tag = 'scoped memory for _forward_impl.1']
    #allocation4 [shape = 'u8[32768]{0}', space=vmem, size = 0x8000, scoped, tag = 'input window, operand 7, single buffered']
    #allocation5 [shape = 's32[1]{0}', space=sflag, size = 0x4, scoped, tag = 'scoped memory for _forward_impl.1']
    %14 = vsyncpa [#allocation3], 0
    %15 = vsyncpa [#allocation5], 0
    loop: start=0, step=1, limit=4
    $region2: #{_forward_impl.1} parent=1 // loop_pre_header
      _
    $region3: #{_forward_impl.1} parent=1 // loop_header
      %s17 = sphi 0, %s21
      %p18 = scmp.ge.s32.totalorder %s17, 4
      %s27 = sphi 0, %s29
      %s30 = sphi 0, %s27
      %s31 = sphi 0, %s30
      %s47 = sphi 0, %s31
      %s51 = sphi 0, %s51
      %s53 = sphi 0, %s51
      %s54 = sphi 0, %s53
      %s68 = sphi 0, %s54
      %s72 = sphi 0, %s72
      %s74 = sphi 0, %s72
      %s75 = sphi 0, %s74
      %s89 = sphi 0, %s75
      %s93 = sphi 0, %s93
      %s95 = sphi 0, %s93
      %s96 = sphi 0, %s95
      %s110 = sphi 0, %s96
      %s114 = sphi 0, %s114
      %s116 = sphi 0, %s114
      %s117 = sphi 0, %s116
      %s131 = sphi 0, %s117
      %s135 = sphi 0, %s135
      %s137 = sphi 0, %s135
      %s138 = sphi 0, %s137
      %s152 = sphi 0, %s138
      %s156 = sphi 0, %s156
      %s158 = sphi 0, %s156
      %s159 = sphi 0, %s158
      %s173 = sphi 0, %s159
      %s177 = sphi 0, %s177
      %s179 = sphi 0, %s177
      %s180 = sphi 0, %s179
      %s194 = sphi 0, %s180
      %s198 = sphi 0, %s198
      %s200 = sphi 0, %s198
      %s201 = sphi 0, %s200
      %s215 = sphi 0, %s201
      %s221 = sphi 0, %s223
      %s224 = sphi 0, %s221
      %s225 = sphi 0, %s224
      %s241 = sphi 0, %s225
    $region4: #{_forward_impl.1} parent=1 // loop_header_branch
      %20 = sbr.rel (%p18) target = $region8
    $region5: #{_forward_impl.1} parent=1 // loop_body
      %s22 = ssub.s32 %s17, 1
      %s23 = ssub.s32 %s17, 2
      %s24 = sadd.s32 %s17, 1
      %s25 = ssub.s32 %s17, %s24
      %p26 = scmp.eq.s32.totalorder %s25, 0
      %s28 = sadd.s32 %s27, 1
      %s29 = scalar_select %p26, %s27, %s28
      %p32 = pneg %p26
      %p33 = scmp.eq.s32.totalorder %s17, 1
      %p34 = por %p32, %p33
      %p35 = scmp.ne.s32.totalorder %s27, %s30
      %p36 = scmp.eq.s32.totalorder %s17, 0
      %p37 = por %p35, %p36
      %p38 = scmp.ne.s32.totalorder %s27, %s30
      %p39 = scmp.eq.s32.totalorder %s22, 1
      %p40 = por %p38, %p39
      %p41 = scmp.ne.s32.totalorder %s30, %s31
      %p42 = scmp.eq.s32.totalorder %s22, 0
      %p43 = por %p41, %p42
      %p44 = scmp.ne.s32.totalorder %s30, %s31
      %p45 = scmp.eq.s32.totalorder %s23, 1
      %p46 = por %p44, %p45
      %p48 = scmp.ne.s32.totalorder %s31, %s47
      %p49 = scmp.eq.s32.totalorder %s23, 0
      %p50 = por %p48, %p49
      %s52 = sadd.s32 %s51, 1
      %p55 = scmp.eq.s32.totalorder %s17, 1
      %p56 = scmp.ne.s32.totalorder %s51, %s53
      %p57 = scmp.eq.s32.totalorder %s17, 0
      %p58 = por %p56, %p57
      %p59 = scmp.ne.s32.totalorder %s51, %s53
      %p60 = scmp.eq.s32.totalorder %s22, 1
      %p61 = por %p59, %p60
      %p62 = scmp.ne.s32.totalorder %s53, %s54
      %p63 = scmp.eq.s32.totalorder %s22, 0
      %p64 = por %p62, %p63
      %p65 = scmp.ne.s32.totalorder %s53, %s54
      %p66 = scmp.eq.s32.totalorder %s23, 1
      %p67 = por %p65, %p66
      %p69 = scmp.ne.s32.totalorder %s54, %s68
      %p70 = scmp.eq.s32.totalorder %s23, 0
      %p71 = por %p69, %p70
      %s73 = sadd.s32 %s72, 1
      %p76 = scmp.eq.s32.totalorder %s17, 1
      %p77 = scmp.ne.s32.totalorder %s72, %s74
      %p78 = scmp.eq.s32.totalorder %s17, 0
      %p79 = por %p77, %p78
      %p80 = scmp.ne.s32.totalorder %s72, %s74
      %p81 = scmp.eq.s32.totalorder %s22, 1
      %p82 = por %p80, %p81
      %p83 = scmp.ne.s32.totalorder %s74, %s75
      %p84 = scmp.eq.s32.totalorder %s22, 0
      %p85 = por %p83, %p84
      %p86 = scmp.ne.s32.totalorder %s74, %s75
      %p87 = scmp.eq.s32.totalorder %s23, 1
      %p88 = por %p86, %p87
      %p90 = scmp.ne.s32.totalorder %s75, %s89
      %p91 = scmp.eq.s32.totalorder %s23, 0
      %p92 = por %p90, %p91
      %s94 = sadd.s32 %s93, 1
      %p97 = scmp.eq.s32.totalorder %s17, 1
      %p98 = scmp.ne.s32.totalorder %s93, %s95
      %p99 = scmp.eq.s32.totalorder %s17, 0
      %p100 = por %p98, %p99
      %p101 = scmp.ne.s32.totalorder %s93, %s95
      %p102 = scmp.eq.s32.totalorder %s22, 1
      %p103 = por %p101, %p102
      %p104 = scmp.ne.s32.totalorder %s95, %s96
      %p105 = scmp.eq.s32.totalorder %s22, 0
      %p106 = por %p104, %p105
      %p107 = scmp.ne.s32.totalorder %s95, %s96
      %p108 = scmp.eq.s32.totalorder %s23, 1
      %p109 = por %p107, %p108
      %p111 = scmp.ne.s32.totalorder %s96, %s110
      %p112 = scmp.eq.s32.totalorder %s23, 0
      %p113 = por %p111, %p112
      %s115 = sadd.s32 %s114, 1
      %p118 = scmp.eq.s32.totalorder %s17, 1
      %p119 = scmp.ne.s32.totalorder %s114, %s116
      %p120 = scmp.eq.s32.totalorder %s17, 0
      %p121 = por %p119, %p120
      %p122 = scmp.ne.s32.totalorder %s114, %s116
      %p123 = scmp.eq.s32.totalorder %s22, 1
      %p124 = por %p122, %p123
      %p125 = scmp.ne.s32.totalorder %s116, %s117
      %p126 = scmp.eq.s32.totalorder %s22, 0
      %p127 = por %p125, %p126
      %p128 = scmp.ne.s32.totalorder %s116, %s117
      %p129 = scmp.eq.s32.totalorder %s23, 1
      %p130 = por %p128, %p129
      %p132 = scmp.ne.s32.totalorder %s117, %s131
      %p133 = scmp.eq.s32.totalorder %s23, 0
      %p134 = por %p132, %p133
      %s136 = sadd.s32 %s135, 1
      %p139 = scmp.eq.s32.totalorder %s17, 1
      %p140 = scmp.ne.s32.totalorder %s135, %s137
      %p141 = scmp.eq.s32.totalorder %s17, 0
      %p142 = por %p140, %p141
      %p143 = scmp.ne.s32.totalorder %s135, %s137
      %p144 = scmp.eq.s32.totalorder %s22, 1
      %p145 = por %p143, %p144
      %p146 = scmp.ne.s32.totalorder %s137, %s138
      %p147 = scmp.eq.s32.totalorder %s22, 0
      %p148 = por %p146, %p147
      %p149 = scmp.ne.s32.totalorder %s137, %s138
      %p150 = scmp.eq.s32.totalorder %s23, 1
      %p151 = por %p149, %p150
      %p153 = scmp.ne.s32.totalorder %s138, %s152
      %p154 = scmp.eq.s32.totalorder %s23, 0
      %p155 = por %p153, %p154
      %s157 = sadd.s32 %s156, 1
      %p160 = scmp.eq.s32.totalorder %s17, 1
      %p161 = scmp.ne.s32.totalorder %s156, %s158
      %p162 = scmp.eq.s32.totalorder %s17, 0
      %p163 = por %p161, %p162
      %p164 = scmp.ne.s32.totalorder %s156, %s158
      %p165 = scmp.eq.s32.totalorder %s22, 1
      %p166 = por %p164, %p165
      %p167 = scmp.ne.s32.totalorder %s158, %s159
      %p168 = scmp.eq.s32.totalorder %s22, 0
      %p169 = por %p167, %p168
      %p170 = scmp.ne.s32.totalorder %s158, %s159
      %p171 = scmp.eq.s32.totalorder %s23, 1
      %p172 = por %p170, %p171
      %p174 = scmp.ne.s32.totalorder %s159, %s173
      %p175 = scmp.eq.s32.totalorder %s23, 0
      %p176 = por %p174, %p175
      %s178 = sadd.s32 %s177, 1
      %p181 = scmp.eq.s32.totalorder %s17, 1
      %p182 = scmp.ne.s32.totalorder %s177, %s179
      %p183 = scmp.eq.s32.totalorder %s17, 0
      %p184 = por %p182, %p183
      %p185 = scmp.ne.s32.totalorder %s177, %s179
      %p186 = scmp.eq.s32.totalorder %s22, 1
      %p187 = por %p185, %p186
      %p188 = scmp.ne.s32.totalorder %s179, %s180
      %p189 = scmp.eq.s32.totalorder %s22, 0
      %p190 = por %p188, %p189
      %p191 = scmp.ne.s32.totalorder %s179, %s180
      %p192 = scmp.eq.s32.totalorder %s23, 1
      %p193 = por %p191, %p192
      %p195 = scmp.ne.s32.totalorder %s180, %s194
      %p196 = scmp.eq.s32.totalorder %s23, 0
      %p197 = por %p195, %p196
      %s199 = sadd.s32 %s198, 1
      %p202 = scmp.eq.s32.totalorder %s17, 1
      %p203 = scmp.ne.s32.totalorder %s198, %s200
      %p204 = scmp.eq.s32.totalorder %s17, 0
      %p205 = por %p203, %p204
      %p206 = scmp.ne.s32.totalorder %s198, %s200
      %p207 = scmp.eq.s32.totalorder %s22, 1
      %p208 = por %p206, %p207
      %p209 = scmp.ne.s32.totalorder %s200, %s201
      %p210 = scmp.eq.s32.totalorder %s22, 0
      %p211 = por %p209, %p210
      %p212 = scmp.ne.s32.totalorder %s200, %s201
      %p213 = scmp.eq.s32.totalorder %s23, 1
      %p214 = por %p212, %p213
      %p216 = scmp.ne.s32.totalorder %s201, %s215
      %p217 = scmp.eq.s32.totalorder %s23, 0
      %p218 = por %p216, %p217
      %s219 = ssub.s32 %s17, %s24
      %p220 = scmp.eq.s32.totalorder %s219, 0
      %s222 = sadd.s32 %s221, 1
      %s223 = scalar_select %p220, %s221, %s222
      %p226 = pneg %p220
      %p227 = scmp.eq.s32.totalorder %s17, 1
      %p228 = por %p226, %p227
      %p229 = scmp.ne.s32.totalorder %s221, %s224
      %p230 = scmp.eq.s32.totalorder %s17, 0
      %p231 = por %p229, %p230
      %p232 = scmp.ne.s32.totalorder %s221, %s224
      %p233 = scmp.eq.s32.totalorder %s22, 1
      %p234 = por %p232, %p233
      %p235 = scmp.ne.s32.totalorder %s224, %s225
      %p236 = scmp.eq.s32.totalorder %s22, 0
      %p237 = por %p235, %p236
      %p238 = scmp.ne.s32.totalorder %s224, %s225
      %p239 = scmp.eq.s32.totalorder %s23, 1
      %p240 = por %p238, %p239
      %p242 = scmp.ne.s32.totalorder %s225, %s241
      %p243 = scmp.eq.s32.totalorder %s23, 0
      %p244 = por %p242, %p243
      %p245 = scmp.le.s32.totalorder 1, %s17
      %p246 = scmp.lt.s32.totalorder %s17, 3
      %p247 = pnand %p245, %p246
      %p248 = pneg %p247
      // Predicated region
      $region9: #{_forward_impl.1} parent=5 // pred_check
        _
      $region10: #{_forward_impl.1} parent=5 // pred_check_branch
        %250 = sbr.rel (%p247) target = $region12
      $region11: #{_forward_impl.1} parent=5 // pred_region
        %s251 = ssub.s32 %s17, 1
        // Predicated region
        $region13: #{_forward_impl.1} parent=11 // pred_check
          %p252 = pneg %p64
        $region14: #{_forward_impl.1} parent=11 // pred_check_branch
          %254 = sbr.rel (%p252) target = $region16
        $region15: #{_forward_impl.1} parent=11 // pred_region
          _
        $region16: #{_forward_impl.1} parent=11 // pred_fallthru
          _
        // Predicated region
        $region17: #{_forward_impl.1} parent=11 // pred_check
          %p255 = pneg %p85
        $region18: #{_forward_impl.1} parent=11 // pred_check_branch
          %257 = sbr.rel (%p255) target = $region20
        $region19: #{_forward_impl.1} parent=11 // pred_region
          _
        $region20: #{_forward_impl.1} parent=11 // pred_fallthru
          _
        // Predicated region
        $region21: #{_forward_impl.1} parent=11 // pred_check
          %p258 = pneg %p106
        $region22: #{_forward_impl.1} parent=11 // pred_check_branch
          %260 = sbr.rel (%p258) target = $region24
        $region23: #{_forward_impl.1} parent=11 // pred_region
          _
        $region24: #{_forward_impl.1} parent=11 // pred_fallthru
          _
        // Predicated region
        $region25: #{_forward_impl.1} parent=11 // pred_check
          %p261 = pneg %p127
        $region26: #{_forward_impl.1} parent=11 // pred_check_branch
          %263 = sbr.rel (%p261) target = $region28
        $region27: #{_forward_impl.1} parent=11 // pred_region
          _
        $region28: #{_forward_impl.1} parent=11 // pred_fallthru
          _
        // Predicated region
        $region29: #{_forward_impl.1} parent=11 // pred_check
          %p264 = pneg %p148
        $region30: #{_forward_impl.1} parent=11 // pred_check_branch
          %266 = sbr.rel (%p264) target = $region32
        $region31: #{_forward_impl.1} parent=11 // pred_region
          %s268 = ssub.s32 1024, 1024
          %269 = vsyncadd [#allocation3], %s268
          %s270 = sshll.u32 [#allocation2], 4
          %s271 = int_to_ptr.vmem [resolvable:$true] %s270
          %276 = dma.hbm_to_vmem [thread:$0]  %s5, 1024, %s271, [#allocation3], 64, 64, 4
        $region32: #{_forward_impl.1} parent=11 // pred_fallthru
          _
        // Predicated region
        $region33: #{_forward_impl.1} parent=11 // pred_check
          %p277 = pneg %p169
        $region34: #{_forward_impl.1} parent=11 // pred_check_branch
          %279 = sbr.rel (%p277) target = $region36
        $region35: #{_forward_impl.1} parent=11 // pred_region
          _
        $region36: #{_forward_impl.1} parent=11 // pred_fallthru
          _
        // Predicated region
        $region37: #{_forward_impl.1} parent=11 // pred_check
          %p280 = pneg %p190
        $region38: #{_forward_impl.1} parent=11 // pred_check_branch
          %282 = sbr.rel (%p280) target = $region40
        $region39: #{_forward_impl.1} parent=11 // pred_region
          %s284 = ssub.s32 1024, 1024
          %285 = vsyncadd [#allocation5], %s284
          %s286 = sshll.u32 [#allocation4], 4
          %s287 = int_to_ptr.vmem [resolvable:$true] %s286
          %292 = dma.hbm_to_vmem [thread:$0]  %s7, 1024, %s287, [#allocation5], 64, 64, 4
        $region40: #{_forward_impl.1} parent=11 // pred_fallthru
          _
        // Predicated region
        $region41: #{_forward_impl.1} parent=11 // pred_check
          %p293 = pneg %p211
        $region42: #{_forward_impl.1} parent=11 // pred_check_branch
          %295 = sbr.rel (%p293) target = $region44
        $region43: #{_forward_impl.1} parent=11 // pred_region
          _
        $region44: #{_forward_impl.1} parent=11 // pred_fallthru
          _
      $region12: #{_forward_impl.1} parent=5 // pred_fallthru
        _
      %p296 = scmp.lt.s32.totalorder %s17, 2
      // Predicated region
      $region45: #{_forward_impl.1} parent=5 // pred_check
        %p297 = pneg %p296
      $region46: #{_forward_impl.1} parent=5 // pred_check_branch
        %299 = sbr.rel (%p297) target = $region48
      $region47: #{_forward_impl.1} parent=5 // pred_region
        // Predicated region
        $region49: #{_forward_impl.1} parent=47 // pred_check
          %p300 = pneg %p37
        $region50: #{_forward_impl.1} parent=47 // pred_check_branch
          %302 = sbr.rel (%p300) target = $region52
        $region51: #{_forward_impl.1} parent=47 // pred_region
          %s303 = smul.u32 4, %s17
          %p304 = scmp.lt.s32.totalorder %s303, 7
          %s305 = scalar_select %p304, %s303, 7
          %s306 = smul.addr %s305, 4
          %s307 = scalar_lea.vmem %s0, %s306
          %s308 = smul.u32 4, %s17
        $region52: #{_forward_impl.1} parent=47 // pred_fallthru
          _
      $region48: #{_forward_impl.1} parent=5 // pred_fallthru
        _
      %p309 = scmp.le.s32.totalorder 1, %s17
      %p310 = scmp.lt.s32.totalorder %s17, 3
      %p311 = pnand %p309, %p310
      %p312 = pneg %p311
      // Predicated region
      $region53: #{_forward_impl.1} parent=5 // pred_check
        _
      $region54: #{_forward_impl.1} parent=5 // pred_check_branch
        %314 = sbr.rel (%p311) target = $region56
      $region55: #{_forward_impl.1} parent=5 // pred_region
        %s315 = ssub.s32 %s17, 1
        // Predicated region
        $region57: #{_forward_impl.1} parent=55 // pred_check
          %p316 = pneg %p148
        $region58: #{_forward_impl.1} parent=55 // pred_check_branch
          %318 = sbr.rel (%p316) target = $region60
        $region59: #{_forward_impl.1} parent=55 // pred_region
          %319 = dma.done [#allocation3], 1024
        $region60: #{_forward_impl.1} parent=55 // pred_fallthru
          _
        // Predicated region
        $region61: #{_forward_impl.1} parent=55 // pred_check
          %p320 = pneg %p190
        $region62: #{_forward_impl.1} parent=55 // pred_check_branch
          %322 = sbr.rel (%p320) target = $region64
        $region63: #{_forward_impl.1} parent=55 // pred_region
          %323 = dma.done [#allocation5], 1024
        $region64: #{_forward_impl.1} parent=55 // pred_fallthru
          _
        %s324 = smul.u32 4, %s22
        %p325 = scmp.lt.s32.totalorder %s324, 7
        %s326 = scalar_select %p325, %s324, 7
        %s327 = smul.addr %s326, 4
        %s328 = scalar_lea.vmem %s0, %s327
        %p329 = pneg %p43
        %p330 = pneg %p40
        %p331 = pneg %p64
        %p332 = pneg %p61
        %p333 = pneg %p85
        %p334 = pneg %p82
        %p335 = pneg %p106
        %p336 = pneg %p103
        %p337 = pneg %p127
        %p338 = pneg %p124
        %p339 = pneg %p148
        %p340 = pneg %p145
        %p341 = pneg %p169
        %p342 = pneg %p166
        %p343 = pneg %p190
        %p344 = pneg %p187
        %p345 = pneg %p211
        %p346 = pneg %p208
        %p347 = pneg %p237
        %p348 = pneg %p234
        %s349 = smul.u32 4, %s22
        %p350 = scmp.lt.s32.totalorder %s349, 7
        %s351 = scalar_select %p350, %s349, 7
        %s352 = smul.addr %s351, 4
        %s353 = scalar_lea.vmem %s9, %s352
        %s354 = smul.u32 4, %s22
        %p355 = scmp.lt.s32.totalorder %s354, 7
        %s356 = scalar_select %p355, %s354, 7
        %s357 = smul.addr %s356, 4
        %s358 = scalar_lea.vmem %s0, %s357
        %s359 = smul.u32 4, %s22
        %s360 = smul.u32 4, %s22
        %p361 = scmp.lt.s32.totalorder %s360, 7
        %s362 = scalar_select %p361, %s360, 7
        %s363 = smul.addr %s362, 4
        %s364 = scalar_lea.vmem %s9, %s363
        %s365 = smul.u32 4, %s22
        %v367 = vld [vmem:[%s358] sm:$0xf]
        %v368 = vld [vmem:[%s358 + $0x4] sm:$0xf]
        %v369 = vld [vmem:[%s358 + $0x8] sm:$0xf]
        %v370 = vld [vmem:[%s358 + $0xc] sm:$0xf]
        %v371 = vld [vmem:[%s1] sm:$0xf]
        %v372 = vld [vmem:[%s1 + $0x4] sm:$0xf]
        %v373 = vld [vmem:[%s1 + $0x8] sm:$0xf]
        %v374 = vld [vmem:[%s1 + $0xc] sm:$0xf]
        %v375 = vld [vmem:[%s1 + $0x10] sm:$0xf]
        %v376 = vld [vmem:[%s1 + $0x14] sm:$0xf]
        %v377 = vld [vmem:[%s1 + $0x18] sm:$0xf]
        %v378 = vld [vmem:[%s1 + $0x1c] sm:$0xf]
        %v379 = vld [vmem:[%s1 + $0x20] sm:$0xf]
        %v380 = vld [vmem:[%s1 + $0x24] sm:$0xf]
        %v381 = vld [vmem:[%s1 + $0x28] sm:$0xf]
        %v382 = vld [vmem:[%s1 + $0x2c] sm:$0xf]
        %v383 = vld [vmem:[%s1 + $0x30] sm:$0xf]
        %v384 = vld [vmem:[%s1 + $0x34] sm:$0xf]
        %v385 = vld [vmem:[%s1 + $0x38] sm:$0xf]
        %v386 = vld [vmem:[%s1 + $0x3c] sm:$0xf]
        %v387 = vld [vmem:[%s2] sm:$0x1]
        %v389 = vlaneseq
        %v390 = vshrl.u32 %v389, 7
        %v391 = vsub.s32 0, %v390
        %v392 = vrot.slane %v387, %v391
        %v398 = vunpack.c.l.b16 %v367
        %v399 = vunpack.c.l.b16 %v368
        %v400 = vunpack.c.l.b16 %v369
        %v401 = vunpack.c.l.b16 %v370
        %v402 = vpack.c.b16 %v399, %v398
        %v403 = vpack.c.b16 %v401, %v400
        %v422 = vunpack.c.l.b16 %v371
        %v423 = vunpack.c.l.b16 %v372
        %v424 = vunpack.c.l.b16 %v373
        %v425 = vunpack.c.l.b16 %v374
        %v426 = vunpack.c.l.b16 %v375
        %v427 = vunpack.c.l.b16 %v376
        %v428 = vunpack.c.l.b16 %v377
        %v429 = vunpack.c.l.b16 %v378
        %v430 = vunpack.c.l.b16 %v379
        %v431 = vunpack.c.l.b16 %v380
        %v432 = vunpack.c.l.b16 %v381
        %v433 = vunpack.c.l.b16 %v382
        %v434 = vunpack.c.l.b16 %v383
        %v435 = vunpack.c.l.b16 %v384
        %v436 = vunpack.c.l.b16 %v385
        %v437 = vunpack.c.l.b16 %v386
        %v438 = vpack.c.b16 %v423, %v422
        %v439 = vpack.c.b16 %v425, %v424
        %v440 = vpack.c.b16 %v427, %v426
        %v441 = vpack.c.b16 %v429, %v428
        %v442 = vpack.c.b16 %v431, %v430
        %v443 = vpack.c.b16 %v433, %v432
        %v444 = vpack.c.b16 %v435, %v434
        %v445 = vpack.c.b16 %v437, %v436
        %454 = vmatprep.subr.bf16.mxu0 0
        %455 = vmatpush1.bf16.msra.mxu0 %v438
        %456 = vmatprep.subr.bf16.mxu0 0
        %457 = vmatpush1.bf16.msra.mxu0 %v439
        %458 = vmatprep.subr.bf16.mxu0 0
        %459 = vmatpush1.bf16.msra.mxu0 %v440
        %460 = vmatprep.subr.bf16.mxu0 0
        %461 = vmatpush1.bf16.msra.mxu0 %v441
        %462 = vmatprep.subr.bf16.mxu0 0
        %463 = vmatpush1.bf16.msra.mxu0 %v442
        %464 = vmatprep.subr.bf16.mxu0 0
        %465 = vmatpush1.bf16.msra.mxu0 %v443
        %466 = vmatprep.subr.bf16.mxu0 0
        %467 = vmatpush1.bf16.msra.mxu0 %v444
        %468 = vmatprep.subr.bf16.mxu0 0
        %469 = vmatpush1.bf16.msra.mxu0 %v445
        %470 = vmatprep.subr.bf16.mxu0 0
        %471 = vmatpush1.bf16.msra.mxu0 0
        %472 = vmatprep.subr.bf16.mxu0 0
        %473 = vmatpush1.bf16.msra.mxu0 0
        %474 = vmatprep.subr.bf16.mxu0 0
        %475 = vmatpush1.bf16.msra.mxu0 0
        %476 = vmatprep.subr.bf16.mxu0 0
        %477 = vmatpush1.bf16.msra.mxu0 0
        %478 = vmatprep.subr.bf16.mxu0 0
        %479 = vmatpush1.bf16.msra.mxu0 0
        %480 = vmatprep.subr.bf16.mxu0 0
        %481 = vmatpush1.bf16.msra.mxu0 0
        %482 = vmatprep.subr.bf16.mxu0 0
        %483 = vmatpush1.bf16.msra.mxu0 0
        %484 = vmatprep.subr.bf16.mxu0 0
        %485 = vmatpush1.bf16.msra.mxu0 0
        %486 = vmatprep.mubr.bf16.mxu0 0
        %487 = vmatmul.mubr.bf16.gmra.mrb[0].mxu0 %v402
        %v488 = vpop.f32.mrb[0].mxu0
        %v489 = vadd.f32 %v392, %v488
        %v490 = vpop.f32.mrb[0].mxu0
        %v491 = vpop.f32.mrb[0].mxu0
        %v492 = vadd.f32 %v392, %v491
        %v493 = vpop.f32.mrb[0].mxu0
        %494 = vmatprep.mubr.bf16.mxu0 0
        %495 = vmatmul.mubr.bf16.gmra.mrb[0].mxu0 %v403
        %v496 = vpop.f32.mrb[0].mxu0
        %v497 = vadd.f32 %v392, %v496
        %v498 = vpop.f32.mrb[0].mxu0
        %v499 = vpop.f32.mrb[0].mxu0
        %v500 = vadd.f32 %v392, %v499
        %v501 = vpop.f32.mrb[0].mxu0
        %502 = vdwg.mxu0
        %v503 = vmax.f32 %v489, 0.0
        %v504 = vmax.f32 %v492, 0.0
        %v505 = vmax.f32 %v497, 0.0
        %v506 = vmax.f32 %v500, 0.0
        %v507 = vpack.c.bf16 %v504, %v503
        %v508 = vpack.c.bf16 %v506, %v505
        %v509 = vld [vmem:[%s3] sm:$0xf]
        %v510 = vld [vmem:[%s3 + $0x4] sm:$0xf]
        %v511 = vld [vmem:[%s3 + $0x8] sm:$0xf]
        %v512 = vld [vmem:[%s3 + $0xc] sm:$0xf]
        %v513 = vld [vmem:[%s3 + $0x10] sm:$0xf]
        %v514 = vld [vmem:[%s3 + $0x14] sm:$0xf]
        %v515 = vld [vmem:[%s3 + $0x18] sm:$0xf]
        %v516 = vld [vmem:[%s3 + $0x1c] sm:$0xf]
        %v517 = vld [vmem:[%s3 + $0x20] sm:$0xf]
        %v518 = vld [vmem:[%s3 + $0x24] sm:$0xf]
        %v519 = vld [vmem:[%s3 + $0x28] sm:$0xf]
        %v520 = vld [vmem:[%s3 + $0x2c] sm:$0xf]
        %v521 = vld [vmem:[%s3 + $0x30] sm:$0xf]
        %v522 = vld [vmem:[%s3 + $0x34] sm:$0xf]
        %v523 = vld [vmem:[%s3 + $0x38] sm:$0xf]
        %v524 = vld [vmem:[%s3 + $0x3c] sm:$0xf]
        %v525 = vld [vmem:[%s4] sm:$0x1]
        %v527 = vlaneseq
        %v528 = vshrl.u32 %v527, 7
        %v529 = vsub.s32 0, %v528
        %v530 = vrot.slane %v525, %v529
        %v548 = vunpack.c.l.b16 %v509
        %v549 = vunpack.c.l.b16 %v510
        %v550 = vunpack.c.l.b16 %v511
        %v551 = vunpack.c.l.b16 %v512
        %v552 = vunpack.c.l.b16 %v513
        %v553 = vunpack.c.l.b16 %v514
        %v554 = vunpack.c.l.b16 %v515
        %v555 = vunpack.c.l.b16 %v516
        %v556 = vunpack.c.l.b16 %v517
        %v557 = vunpack.c.l.b16 %v518
        %v558 = vunpack.c.l.b16 %v519
        %v559 = vunpack.c.l.b16 %v520
        %v560 = vunpack.c.l.b16 %v521
        %v561 = vunpack.c.l.b16 %v522
        %v562 = vunpack.c.l.b16 %v523
        %v563 = vunpack.c.l.b16 %v524
        %v564 = vpack.c.b16 %v549, %v548
        %v565 = vpack.c.b16 %v551, %v550
        %v566 = vpack.c.b16 %v553, %v552
        %v567 = vpack.c.b16 %v555, %v554
        %v568 = vpack.c.b16 %v557, %v556
        %v569 = vpack.c.b16 %v559, %v558
        %v570 = vpack.c.b16 %v561, %v560
        %v571 = vpack.c.b16 %v563, %v562
        %580 = vmatprep.subr.bf16.mxu0 0
        %581 = vmatpush1.bf16.msra.mxu0 %v564
        %582 = vmatprep.subr.bf16.mxu0 0
        %583 = vmatpush1.bf16.msra.mxu0 %v565
        %584 = vmatprep.subr.bf16.mxu0 0
        %585 = vmatpush1.bf16.msra.mxu0 %v566
        %586 = vmatprep.subr.bf16.mxu0 0
        %587 = vmatpush1.bf16.msra.mxu0 %v567
        %588 = vmatprep.subr.bf16.mxu0 0
        %589 = vmatpush1.bf16.msra.mxu0 %v568
        %590 = vmatprep.subr.bf16.mxu0 0
        %591 = vmatpush1.bf16.msra.mxu0 %v569
        %592 = vmatprep.subr.bf16.mxu0 0
        %593 = vmatpush1.bf16.msra.mxu0 %v570
        %594 = vmatprep.subr.bf16.mxu0 0
        %595 = vmatpush1.bf16.msra.mxu0 %v571
        %596 = vmatprep.subr.bf16.mxu0 0
        %597 = vmatpush1.bf16.msra.mxu0 0
        %598 = vmatprep.subr.bf16.mxu0 0
        %599 = vmatpush1.bf16.msra.mxu0 0
        %600 = vmatprep.subr.bf16.mxu0 0
        %601 = vmatpush1.bf16.msra.mxu0 0
        %602 = vmatprep.subr.bf16.mxu0 0
        %603 = vmatpush1.bf16.msra.mxu0 0
        %604 = vmatprep.subr.bf16.mxu0 0
        %605 = vmatpush1.bf16.msra.mxu0 0
        %606 = vmatprep.subr.bf16.mxu0 0
        %607 = vmatpush1.bf16.msra.mxu0 0
        %608 = vmatprep.subr.bf16.mxu0 0
        %609 = vmatpush1.bf16.msra.mxu0 0
        %610 = vmatprep.subr.bf16.mxu0 0
        %611 = vmatpush1.bf16.msra.mxu0 0
        %612 = vmatprep.mubr.bf16.mxu0 0
        %613 = vmatmul.mubr.bf16.gmra.mrb[0].mxu0 %v507
        %v614 = vpop.f32.mrb[0].mxu0
        %v615 = vadd.f32 %v530, %v614
        %v616 = vpop.f32.mrb[0].mxu0
        %v617 = vpop.f32.mrb[0].mxu0
        %v618 = vadd.f32 %v530, %v617
        %v619 = vpop.f32.mrb[0].mxu0
        %620 = vmatprep.mubr.bf16.mxu0 0
        %621 = vmatmul.mubr.bf16.gmra.mrb[0].mxu0 %v508
        %v622 = vpop.f32.mrb[0].mxu0
        %v623 = vadd.f32 %v530, %v622
        %v624 = vpop.f32.mrb[0].mxu0
        %v625 = vpop.f32.mrb[0].mxu0
        %v626 = vadd.f32 %v530, %v625
        %v627 = vpop.f32.mrb[0].mxu0
        %628 = vdwg.mxu0
        %v629 = vpack.c.bf16 %v618, %v615
        %v630 = vpack.c.bf16 %v626, %v623
        %v631 = vld [vmem:[#allocation2] sm:$0xf]
        %v632 = vld [vmem:[#allocation2 + $0x4] sm:$0xf]
        %v633 = vld [vmem:[#allocation2 + $0x8] sm:$0xf]
        %v634 = vld [vmem:[#allocation2 + $0xc] sm:$0xf]
        %v635 = vld [vmem:[#allocation2 + $0x10] sm:$0xf]
        %v636 = vld [vmem:[#allocation2 + $0x14] sm:$0xf]
        %v637 = vld [vmem:[#allocation2 + $0x18] sm:$0xf]
        %v638 = vld [vmem:[#allocation2 + $0x1c] sm:$0xf]
        %v639 = vld [vmem:[#allocation2 + $0x20] sm:$0xf]
        %v640 = vld [vmem:[#allocation2 + $0x24] sm:$0xf]
        %v641 = vld [vmem:[#allocation2 + $0x28] sm:$0xf]
        %v642 = vld [vmem:[#allocation2 + $0x2c] sm:$0xf]
        %v643 = vld [vmem:[#allocation2 + $0x30] sm:$0xf]
        %v644 = vld [vmem:[#allocation2 + $0x34] sm:$0xf]
        %v645 = vld [vmem:[#allocation2 + $0x38] sm:$0xf]
        %v646 = vld [vmem:[#allocation2 + $0x3c] sm:$0xf]
        %v647 = vld [vmem:[%s6] sm:$0x1]
        %v649 = vlaneseq
        %v650 = vshrl.u32 %v649, 7
        %v651 = vsub.s32 0, %v650
        %v652 = vrot.slane %v647, %v651
        %v670 = vunpack.c.l.b16 %v631
        %v671 = vunpack.c.l.b16 %v632
        %v672 = vunpack.c.l.b16 %v633
        %v673 = vunpack.c.l.b16 %v634
        %v674 = vunpack.c.l.b16 %v635
        %v675 = vunpack.c.l.b16 %v636
        %v676 = vunpack.c.l.b16 %v637
        %v677 = vunpack.c.l.b16 %v638
        %v678 = vunpack.c.l.b16 %v639
        %v679 = vunpack.c.l.b16 %v640
        %v680 = vunpack.c.l.b16 %v641
        %v681 = vunpack.c.l.b16 %v642
        %v682 = vunpack.c.l.b16 %v643
        %v683 = vunpack.c.l.b16 %v644
        %v684 = vunpack.c.l.b16 %v645
        %v685 = vunpack.c.l.b16 %v646
        %v686 = vpack.c.b16 %v671, %v670
        %v687 = vpack.c.b16 %v673, %v672
        %v688 = vpack.c.b16 %v675, %v674
        %v689 = vpack.c.b16 %v677, %v676
        %v690 = vpack.c.b16 %v679, %v678
        %v691 = vpack.c.b16 %v681, %v680
        %v692 = vpack.c.b16 %v683, %v682
        %v693 = vpack.c.b16 %v685, %v684
        %702 = vmatprep.subr.bf16.mxu0 0
        %703 = vmatpush1.bf16.msra.mxu0 %v686
        %704 = vmatprep.subr.bf16.mxu0 0
        %705 = vmatpush1.bf16.msra.mxu0 %v687
        %706 = vmatprep.subr.bf16.mxu0 0
        %707 = vmatpush1.bf16.msra.mxu0 %v688
        %708 = vmatprep.subr.bf16.mxu0 0
        %709 = vmatpush1.bf16.msra.mxu0 %v689
        %710 = vmatprep.subr.bf16.mxu0 0
        %711 = vmatpush1.bf16.msra.mxu0 %v690
        %712 = vmatprep.subr.bf16.mxu0 0
        %713 = vmatpush1.bf16.msra.mxu0 %v691
        %714 = vmatprep.subr.bf16.mxu0 0
        %715 = vmatpush1.bf16.msra.mxu0 %v692
        %716 = vmatprep.subr.bf16.mxu0 0
        %717 = vmatpush1.bf16.msra.mxu0 %v693
        %718 = vmatprep.subr.bf16.mxu0 0
        %719 = vmatpush1.bf16.msra.mxu0 0
        %720 = vmatprep.subr.bf16.mxu0 0
        %721 = vmatpush1.bf16.msra.mxu0 0
        %722 = vmatprep.subr.bf16.mxu0 0
        %723 = vmatpush1.bf16.msra.mxu0 0
        %724 = vmatprep.subr.bf16.mxu0 0
        %725 = vmatpush1.bf16.msra.mxu0 0
        %726 = vmatprep.subr.bf16.mxu0 0
        %727 = vmatpush1.bf16.msra.mxu0 0
        %728 = vmatprep.subr.bf16.mxu0 0
        %729 = vmatpush1.bf16.msra.mxu0 0
        %730 = vmatprep.subr.bf16.mxu0 0
        %731 = vmatpush1.bf16.msra.mxu0 0
        %732 = vmatprep.subr.bf16.mxu0 0
        %733 = vmatpush1.bf16.msra.mxu0 0
        %734 = vmatprep.mubr.bf16.mxu0 0
        %735 = vmatmul.mubr.bf16.gmra.mrb[0].mxu0 %v629
        %v736 = vpop.f32.mrb[0].mxu0
        %v737 = vadd.f32 %v652, %v736
        %v738 = vpop.f32.mrb[0].mxu0
        %v739 = vpop.f32.mrb[0].mxu0
        %v740 = vadd.f32 %v652, %v739
        %v741 = vpop.f32.mrb[0].mxu0
        %742 = vmatprep.mubr.bf16.mxu0 0
        %743 = vmatmul.mubr.bf16.gmra.mrb[0].mxu0 %v630
        %v744 = vpop.f32.mrb[0].mxu0
        %v745 = vadd.f32 %v652, %v744
        %v746 = vpop.f32.mrb[0].mxu0
        %v747 = vpop.f32.mrb[0].mxu0
        %v748 = vadd.f32 %v652, %v747
        %v749 = vpop.f32.mrb[0].mxu0
        %750 = vdwg.mxu0
        %v751 = vmax.f32 %v737, 0.0
        %v752 = vmax.f32 %v740, 0.0
        %v753 = vmax.f32 %v745, 0.0
        %v754 = vmax.f32 %v748, 0.0
        %v755 = vpack.c.bf16 %v752, %v751
        %v756 = vpack.c.bf16 %v754, %v753
        %v757 = vld [vmem:[#allocation4] sm:$0xf]
        %v758 = vld [vmem:[#allocation4 + $0x4] sm:$0xf]
        %v759 = vld [vmem:[#allocation4 + $0x8] sm:$0xf]
        %v760 = vld [vmem:[#allocation4 + $0xc] sm:$0xf]
        %v761 = vld [vmem:[#allocation4 + $0x10] sm:$0xf]
        %v762 = vld [vmem:[#allocation4 + $0x14] sm:$0xf]
        %v763 = vld [vmem:[#allocation4 + $0x18] sm:$0xf]
        %v764 = vld [vmem:[#allocation4 + $0x1c] sm:$0xf]
        %v765 = vld [vmem:[#allocation4 + $0x20] sm:$0xf]
        %v766 = vld [vmem:[#allocation4 + $0x24] sm:$0xf]
        %v767 = vld [vmem:[#allocation4 + $0x28] sm:$0xf]
        %v768 = vld [vmem:[#allocation4 + $0x2c] sm:$0xf]
        %v769 = vld [vmem:[#allocation4 + $0x30] sm:$0xf]
        %v770 = vld [vmem:[#allocation4 + $0x34] sm:$0xf]
        %v771 = vld [vmem:[#allocation4 + $0x38] sm:$0xf]
        %v772 = vld [vmem:[#allocation4 + $0x3c] sm:$0xf]
        %v773 = vld [vmem:[%s8] sm:$0x1]
        %v775 = vlaneseq
        %v776 = vshrl.u32 %v775, 7
        %v777 = vsub.s32 0, %v776
        %v778 = vrot.slane %v773, %v777
        %v796 = vunpack.c.l.b16 %v757
        %v797 = vunpack.c.l.b16 %v758
        %v798 = vunpack.c.l.b16 %v759
        %v799 = vunpack.c.l.b16 %v760
        %v800 = vunpack.c.l.b16 %v761
        %v801 = vunpack.c.l.b16 %v762
        %v802 = vunpack.c.l.b16 %v763
        %v803 = vunpack.c.l.b16 %v764
        %v804 = vunpack.c.l.b16 %v765
        %v805 = vunpack.c.l.b16 %v766
        %v806 = vunpack.c.l.b16 %v767
        %v807 = vunpack.c.l.b16 %v768
        %v808 = vunpack.c.l.b16 %v769
        %v809 = vunpack.c.l.b16 %v770
        %v810 = vunpack.c.l.b16 %v771
        %v811 = vunpack.c.l.b16 %v772
        %v812 = vpack.c.b16 %v797, %v796
        %v813 = vpack.c.b16 %v799, %v798
        %v814 = vpack.c.b16 %v801, %v800
        %v815 = vpack.c.b16 %v803, %v802
        %v816 = vpack.c.b16 %v805, %v804
        %v817 = vpack.c.b16 %v807, %v806
        %v818 = vpack.c.b16 %v809, %v808
        %v819 = vpack.c.b16 %v811, %v810
        %828 = vmatprep.subr.bf16.mxu0 0
        %829 = vmatpush1.bf16.msra.mxu0 %v812
        %830 = vmatprep.subr.bf16.mxu0 0
        %831 = vmatpush1.bf16.msra.mxu0 %v813
        %832 = vmatprep.subr.bf16.mxu0 0
        %833 = vmatpush1.bf16.msra.mxu0 %v814
        %834 = vmatprep.subr.bf16.mxu0 0
        %835 = vmatpush1.bf16.msra.mxu0 %v815
        %836 = vmatprep.subr.bf16.mxu0 0
        %837 = vmatpush1.bf16.msra.mxu0 %v816
        %838 = vmatprep.subr.bf16.mxu0 0
        %839 = vmatpush1.bf16.msra.mxu0 %v817
        %840 = vmatprep.subr.bf16.mxu0 0
        %841 = vmatpush1.bf16.msra.mxu0 %v818
        %842 = vmatprep.subr.bf16.mxu0 0
        %843 = vmatpush1.bf16.msra.mxu0 %v819
        %844 = vmatprep.subr.bf16.mxu0 0
        %845 = vmatpush1.bf16.msra.mxu0 0
        %846 = vmatprep.subr.bf16.mxu0 0
        %847 = vmatpush1.bf16.msra.mxu0 0
        %848 = vmatprep.subr.bf16.mxu0 0
        %849 = vmatpush1.bf16.msra.mxu0 0
        %850 = vmatprep.subr.bf16.mxu0 0
        %851 = vmatpush1.bf16.msra.mxu0 0
        %852 = vmatprep.subr.bf16.mxu0 0
        %853 = vmatpush1.bf16.msra.mxu0 0
        %854 = vmatprep.subr.bf16.mxu0 0
        %855 = vmatpush1.bf16.msra.mxu0 0
        %856 = vmatprep.subr.bf16.mxu0 0
        %857 = vmatpush1.bf16.msra.mxu0 0
        %858 = vmatprep.subr.bf16.mxu0 0
        %859 = vmatpush1.bf16.msra.mxu0 0
        %860 = vmatprep.mubr.bf16.mxu0 0
        %861 = vmatmul.mubr.bf16.gmra.mrb[0].mxu0 %v755
        %v862 = vpop.f32.mrb[0].mxu0
        %v863 = vadd.f32 %v778, %v862
        %v864 = vpop.f32.mrb[0].mxu0
        %v865 = vpop.f32.mrb[0].mxu0
        %v866 = vadd.f32 %v778, %v865
        %v867 = vpop.f32.mrb[0].mxu0
        %868 = vmatprep.mubr.bf16.mxu0 0
        %869 = vmatmul.mubr.bf16.gmra.mrb[0].mxu0 %v756
        %v870 = vpop.f32.mrb[0].mxu0
        %v871 = vadd.f32 %v778, %v870
        %v872 = vpop.f32.mrb[0].mxu0
        %v873 = vpop.f32.mrb[0].mxu0
        %v874 = vadd.f32 %v778, %v873
        %v875 = vpop.f32.mrb[0].mxu0
        %876 = vdwg.mxu0
        %v877 = vpack.c.bf16 %v866, %v863
        %v878 = vpack.c.bf16 %v874, %v871
        %v881 = vunpack.c.l.b16 %v877
        %v882 = vunpack.c.h.b16 %v877
        %v883 = vunpack.c.l.b16 %v878
        %v884 = vunpack.c.h.b16 %v878
        %v885 = vpack.c.b16 %v881, %v881
        %v886 = vpack.c.b16 %v882, %v882
        %v887 = vpack.c.b16 %v883, %v883
        %v888 = vpack.c.b16 %v884, %v884
        %893 = vst [vmem:[%s364] sm:$0xf] %v885
        %894 = vst [vmem:[%s364 + $0x4] sm:$0xf] %v886
        %895 = vst [vmem:[%s364 + $0x8] sm:$0xf] %v887
        %896 = vst [vmem:[%s364 + $0xc] sm:$0xf] %v888
        %s897 = smul.u32 4, %s22
        %p898 = scmp.lt.s32.totalorder %s897, 7
        %s899 = scalar_select %p898, %s897, 7
        %s900 = smul.addr %s899, 4
        %s901 = scalar_lea.vmem %s9, %s900
        // Predicated region
        $region65: #{_forward_impl.1} parent=55 // pred_check
          %p902 = pneg %p234
        $region66: #{_forward_impl.1} parent=55 // pred_check_branch
          %904 = sbr.rel (%p902) target = $region68
        $region67: #{_forward_impl.1} parent=55 // pred_region
          %s905 = smul.u32 4, %s22
        $region68: #{_forward_impl.1} parent=55 // pred_fallthru
          _
      $region56: #{_forward_impl.1} parent=5 // pred_fallthru
        _
      %p906 = scmp.le.s32.totalorder 2, %s17
      // Predicated region
      $region69: #{_forward_impl.1} parent=5 // pred_check
        %p907 = pneg %p906
      $region70: #{_forward_impl.1} parent=5 // pred_check_branch
        %909 = sbr.rel (%p907) target = $region72
      $region71: #{_forward_impl.1} parent=5 // pred_region
        %s910 = ssub.s32 %s17, 2
        // Predicated region
        $region73: #{_forward_impl.1} parent=71 // pred_check
          %p911 = pneg %p240
        $region74: #{_forward_impl.1} parent=71 // pred_check_branch
          %913 = sbr.rel (%p911) target = $region76
        $region75: #{_forward_impl.1} parent=71 // pred_region
          %s914 = smul.u32 4, %s23
          %p915 = scmp.lt.s32.totalorder %s914, 7
          %s916 = scalar_select %p915, %s914, 7
          %s917 = smul.addr %s916, 4
          %s918 = scalar_lea.vmem %s9, %s917
        $region76: #{_forward_impl.1} parent=71 // pred_fallthru
          _
      $region72: #{_forward_impl.1} parent=5 // pred_fallthru
        _
    $region6: #{_forward_impl.1} parent=1 // loop_footer
      %s21 = sadd.s32 1, %s17
    $region7: #{_forward_impl.1} parent=1 // loop_footer_branch
      %16 = sbr.rel target = $region3
    $region8: #{_forward_impl.1} parent=1 // loop_exit
      _
    %919 = vsyncpa [#allocation3], 1
    %s920 = scalar_lea.sflag [#allocation3], 1
    %921 = vsyncpa %s920, 1
    %922 = vsyncpa [#allocation5], 1

// kernel: _forward_impl.1
$region0: #{_forward_impl.1}
  #allocation0 [shape = 'u32[]', space=smem, size = 0x4, offset = 0x4, fixed_abs, tag = 'smem constant byte address 0x4 - core index']
  #allocation1 [shape = 'u32[144,128]{1,0:T(1,128)}', space=vmem, size = 0x12000, scoped, tag = 'internal scratch']
  %s0 = inlined_call_operand.vmem [shape: bf16[64,128], index: 0, kind: input, shape index: {}]
  %s1 = inlined_call_operand.vmem [shape: bf16[128,128], index: 1, kind: input, shape index: {}]
  %s2 = inlined_call_operand.vmem [shape: f32[1,128], index: 2, kind: input, shape index: {}]
  %s3 = inlined_call_operand.vmem [shape: bf16[128,128], index: 3, kind: input, shape index: {}]
  %s4 = inlined_call_operand.vmem [shape: f32[1,128], index: 4, kind: input, shape index: {}]
  %s5 = inlined_call_operand.hbm [shape: bf16[128,128], index: 5, kind: input, shape index: {}]
  %s6 = inlined_call_operand.vmem [shape: f32[1,128], index: 6, kind: input, shape index: {}]
  %s7 = inlined_call_operand.hbm [shape: bf16[128,128], index: 7, kind: input, shape index: {}]
  %s8 = inlined_call_operand.vmem [shape: f32[1,128], index: 8, kind: input, shape index: {}]
  %s9 = inlined_call_operand.vmem [shape: bf16[64,128], index: 9, kind: output, shape index: {}]
  %s10 = sld [smem:[#allocation0]]
  $region77: #{_forward_impl.1} parent=0
    _
  %s12 = ssub.s32 1, %s10
  %s13 = scalar_select 0, %s12, %s10
  $region1: #{_forward_impl.1} parent=0
    #allocation2 [shape = 'u8[32768]{0}', space=vmem, size = 0x8000, scoped, tag = 'input window, operand 5, single buffered']
    #allocation3 [shape = 's32[2]{0}', space=sflag, size = 0x8, scoped, tag = 'scoped memory for _forward_impl.1']
    #allocation4 [shape = 'u8[32768]{0}', space=vmem, size = 0x8000, scoped, tag = 'input window, operand 7, single buffered']
    #allocation5 [shape = 's32[1]{0}', space=sflag, size = 0x4, scoped, tag = 'scoped memory for _forward_impl.1']
    %14 = vsyncpa [#allocation3], 0
    %15 = vsyncpa [#allocation5], 0
    loop: start=0, step=1, limit=4
    $region2: #{_forward_impl.1} parent=1 // loop_pre_header
      _
    $region3: #{_forward_impl.1} parent=1 // loop_header
      %s17 = sphi 0, %s21
      %p18 = scmp.ge.s32.totalorder %s17, 4
      %s27 = sphi 0, %s29
      %s30 = sphi 0, %s27
      %s31 = sphi 0, %s30
      %s47 = sphi 0, %s31
      %s51 = sphi 0, %s51
      %s53 = sphi 0, %s51
      %s54 = sphi 0, %s53
      %s68 = sphi 0, %s54
      %s72 = sphi 0, %s72
      %s74 = sphi 0, %s72
      %s75 = sphi 0, %s74
      %s89 = sphi 0, %s75
      %s93 = sphi 0, %s93
      %s95 = sphi 0, %s93
      %s96 = sphi 0, %s95
      %s110 = sphi 0, %s96
      %s114 = sphi 0, %s114
      %s116 = sphi 0, %s114
      %s117 = sphi 0, %s116
      %s131 = sphi 0, %s117
      %s135 = sphi 0, %s135
      %s137 = sphi 0, %s135
      %s138 = sphi 0, %s137
      %s152 = sphi 0, %s138
      %s156 = sphi 0, %s156
      %s158 = sphi 0, %s156
      %s159 = sphi 0, %s158
      %s173 = sphi 0, %s159
      %s177 = sphi 0, %s177
      %s179 = sphi 0, %s177
      %s180 = sphi 0, %s179
      %s194 = sphi 0, %s180
      %s198 = sphi 0, %s198
      %s200 = sphi 0, %s198
      %s201 = sphi 0, %s200
      %s215 = sphi 0, %s201
      %s221 = sphi 0, %s223
      %s224 = sphi 0, %s221
      %s225 = sphi 0, %s224
      %s241 = sphi 0, %s225
    $region4: #{_forward_impl.1} parent=1 // loop_header_branch
      %20 = sbr.rel (%p18) target = $region8
    $region5: #{_forward_impl.1} parent=1 // loop_body
      %s22 = ssub.s32 %s17, 1
      %s23 = ssub.s32 %s17, 2
      %s24 = sadd.s32 %s17, 1
      %s25 = ssub.s32 %s17, %s24
      %p26 = scmp.eq.s32.totalorder %s25, 0
      %s28 = sadd.s32 %s27, 1
      %s29 = scalar_select %p26, %s27, %s28
      %p32 = pneg %p26
      %p33 = scmp.eq.s32.totalorder %s17, 1
      %p34 = por %p32, %p33
      %p35 = scmp.ne.s32.totalorder %s27, %s30
      %p36 = scmp.eq.s32.totalorder %s17, 0
      %p37 = por %p35, %p36
      %p38 = scmp.ne.s32.totalorder %s27, %s30
      %p39 = scmp.eq.s32.totalorder %s22, 1
      %p40 = por %p38, %p39
      %p41 = scmp.ne.s32.totalorder %s30, %s31
      %p42 = scmp.eq.s32.totalorder %s22, 0
      %p43 = por %p41, %p42
      %p44 = scmp.ne.s32.totalorder %s30, %s31
      %p45 = scmp.eq.s32.totalorder %s23, 1
      %p46 = por %p44, %p45
      %p48 = scmp.ne.s32.totalorder %s31, %s47
      %p49 = scmp.eq.s32.totalorder %s23, 0
      %p50 = por %p48, %p49
      %s52 = sadd.s32 %s51, 1
      %p55 = scmp.eq.s32.totalorder %s17, 1
      %p56 = scmp.ne.s32.totalorder %s51, %s53
      %p57 = scmp.eq.s32.totalorder %s17, 0
      %p58 = por %p56, %p57
      %p59 = scmp.ne.s32.totalorder %s51, %s53
      %p60 = scmp.eq.s32.totalorder %s22, 1
      %p61 = por %p59, %p60
      %p62 = scmp.ne.s32.totalorder %s53, %s54
      %p63 = scmp.eq.s32.totalorder %s22, 0
      %p64 = por %p62, %p63
      %p65 = scmp.ne.s32.totalorder %s53, %s54
      %p66 = scmp.eq.s32.totalorder %s23, 1
      %p67 = por %p65, %p66
      %p69 = scmp.ne.s32.totalorder %s54, %s68
      %p70 = scmp.eq.s32.totalorder %s23, 0
      %p71 = por %p69, %p70
      %s73 = sadd.s32 %s72, 1
      %p76 = scmp.eq.s32.totalorder %s17, 1
      %p77 = scmp.ne.s32.totalorder %s72, %s74
      %p78 = scmp.eq.s32.totalorder %s17, 0
      %p79 = por %p77, %p78
      %p80 = scmp.ne.s32.totalorder %s72, %s74
      %p81 = scmp.eq.s32.totalorder %s22, 1
      %p82 = por %p80, %p81
      %p83 = scmp.ne.s32.totalorder %s74, %s75
      %p84 = scmp.eq.s32.totalorder %s22, 0
      %p85 = por %p83, %p84
      %p86 = scmp.ne.s32.totalorder %s74, %s75
      %p87 = scmp.eq.s32.totalorder %s23, 1
      %p88 = por %p86, %p87
      %p90 = scmp.ne.s32.totalorder %s75, %s89
      %p91 = scmp.eq.s32.totalorder %s23, 0
      %p92 = por %p90, %p91
      %s94 = sadd.s32 %s93, 1
      %p97 = scmp.eq.s32.totalorder %s17, 1
      %p98 = scmp.ne.s32.totalorder %s93, %s95
      %p99 = scmp.eq.s32.totalorder %s17, 0
      %p100 = por %p98, %p99
      %p101 = scmp.ne.s32.totalorder %s93, %s95
      %p102 = scmp.eq.s32.totalorder %s22, 1
      %p103 = por %p101, %p102
      %p104 = scmp.ne.s32.totalorder %s95, %s96
      %p105 = scmp.eq.s32.totalorder %s22, 0
      %p106 = por %p104, %p105
      %p107 = scmp.ne.s32.totalorder %s95, %s96
      %p108 = scmp.eq.s32.totalorder %s23, 1
      %p109 = por %p107, %p108
      %p111 = scmp.ne.s32.totalorder %s96, %s110
      %p112 = scmp.eq.s32.totalorder %s23, 0
      %p113 = por %p111, %p112
      %s115 = sadd.s32 %s114, 1
      %p118 = scmp.eq.s32.totalorder %s17, 1
      %p119 = scmp.ne.s32.totalorder %s114, %s116
      %p120 = scmp.eq.s32.totalorder %s17, 0
      %p121 = por %p119, %p120
      %p122 = scmp.ne.s32.totalorder %s114, %s116
      %p123 = scmp.eq.s32.totalorder %s22, 1
      %p124 = por %p122, %p123
      %p125 = scmp.ne.s32.totalorder %s116, %s117
      %p126 = scmp.eq.s32.totalorder %s22, 0
      %p127 = por %p125, %p126
      %p128 = scmp.ne.s32.totalorder %s116, %s117
      %p129 = scmp.eq.s32.totalorder %s23, 1
      %p130 = por %p128, %p129
      %p132 = scmp.ne.s32.totalorder %s117, %s131
      %p133 = scmp.eq.s32.totalorder %s23, 0
      %p134 = por %p132, %p133
      %s136 = sadd.s32 %s135, 1
      %p139 = scmp.eq.s32.totalorder %s17, 1
      %p140 = scmp.ne.s32.totalorder %s135, %s137
      %p141 = scmp.eq.s32.totalorder %s17, 0
      %p142 = por %p140, %p141
      %p143 = scmp.ne.s32.totalorder %s135, %s137
      %p144 = scmp.eq.s32.totalorder %s22, 1
      %p145 = por %p143, %p144
      %p146 = scmp.ne.s32.totalorder %s137, %s138
      %p147 = scmp.eq.s32.totalorder %s22, 0
      %p148 = por %p146, %p147
      %p149 = scmp.ne.s32.totalorder %s137, %s138
      %p150 = scmp.eq.s32.totalorder %s23, 1
      %p151 = por %p149, %p150
      %p153 = scmp.ne.s32.totalorder %s138, %s152
      %p154 = scmp.eq.s32.totalorder %s23, 0
      %p155 = por %p153, %p154
      %s157 = sadd.s32 %s156, 1
      %p160 = scmp.eq.s32.totalorder %s17, 1
      %p161 = scmp.ne.s32.totalorder %s156, %s158
      %p162 = scmp.eq.s32.totalorder %s17, 0
      %p163 = por %p161, %p162
      %p164 = scmp.ne.s32.totalorder %s156, %s158
      %p165 = scmp.eq.s32.totalorder %s22, 1
      %p166 = por %p164, %p165
      %p167 = scmp.ne.s32.totalorder %s158, %s159
      %p168 = scmp.eq.s32.totalorder %s22, 0
      %p169 = por %p167, %p168
      %p170 = scmp.ne.s32.totalorder %s158, %s159
      %p171 = scmp.eq.s32.totalorder %s23, 1
      %p172 = por %p170, %p171
      %p174 = scmp.ne.s32.totalorder %s159, %s173
      %p175 = scmp.eq.s32.totalorder %s23, 0
      %p176 = por %p174, %p175
      %s178 = sadd.s32 %s177, 1
      %p181 = scmp.eq.s32.totalorder %s17, 1
      %p182 = scmp.ne.s32.totalorder %s177, %s179
      %p183 = scmp.eq.s32.totalorder %s17, 0
      %p184 = por %p182, %p183
      %p185 = scmp.ne.s32.totalorder %s177, %s179
      %p186 = scmp.eq.s32.totalorder %s22, 1
      %p187 = por %p185, %p186
      %p188 = scmp.ne.s32.totalorder %s179, %s180
      %p189 = scmp.eq.s32.totalorder %s22, 0
      %p190 = por %p188, %p189
      %p191 = scmp.ne.s32.totalorder %s179, %s180
      %p192 = scmp.eq.s32.totalorder %s23, 1
      %p193 = por %p191, %p192
      %p195 = scmp.ne.s32.totalorder %s180, %s194
      %p196 = scmp.eq.s32.totalorder %s23, 0
      %p197 = por %p195, %p196
      %s199 = sadd.s32 %s198, 1
      %p202 = scmp.eq.s32.totalorder %s17, 1
      %p203 = scmp.ne.s32.totalorder %s198, %s200
      %p204 = scmp.eq.s32.totalorder %s17, 0
      %p205 = por %p203, %p204
      %p206 = scmp.ne.s32.totalorder %s198, %s200
      %p207 = scmp.eq.s32.totalorder %s22, 1
      %p208 = por %p206, %p207
      %p209 = scmp.ne.s32.totalorder %s200, %s201
      %p210 = scmp.eq.s32.totalorder %s22, 0
      %p211 = por %p209, %p210
      %p212 = scmp.ne.s32.totalorder %s200, %s201
      %p213 = scmp.eq.s32.totalorder %s23, 1
      %p214 = por %p212, %p213
      %p216 = scmp.ne.s32.totalorder %s201, %s215
      %p217 = scmp.eq.s32.totalorder %s23, 0
      %p218 = por %p216, %p217
      %s219 = ssub.s32 %s17, %s24
      %p220 = scmp.eq.s32.totalorder %s219, 0
      %s222 = sadd.s32 %s221, 1
      %s223 = scalar_select %p220, %s221, %s222
      %p226 = pneg %p220
      %p227 = scmp.eq.s32.totalorder %s17, 1
      %p228 = por %p226, %p227
      %p229 = scmp.ne.s32.totalorder %s221, %s224
      %p230 = scmp.eq.s32.totalorder %s17, 0
      %p231 = por %p229, %p230
      %p232 = scmp.ne.s32.totalorder %s221, %s224
      %p233 = scmp.eq.s32.totalorder %s22, 1
      %p234 = por %p232, %p233
      %p235 = scmp.ne.s32.totalorder %s224, %s225
      %p236 = scmp.eq.s32.totalorder %s22, 0
      %p237 = por %p235, %p236
      %p238 = scmp.ne.s32.totalorder %s224, %s225
      %p239 = scmp.eq.s32.totalorder %s23, 1
      %p240 = por %p238, %p239
      %p242 = scmp.ne.s32.totalorder %s225, %s241
      %p243 = scmp.eq.s32.totalorder %s23, 0
      %p244 = por %p242, %p243
      %p245 = scmp.le.s32.totalorder 1, %s17
      %p246 = scmp.lt.s32.totalorder %s17, 3
      %p247 = pnand %p245, %p246
      %p248 = pneg %p247
      // Predicated region
      $region9: #{_forward_impl.1} parent=5 // pred_check
        _
      $region10: #{_forward_impl.1} parent=5 // pred_check_branch
        %250 = sbr.rel (%p247) target = $region12
      $region11: #{_forward_impl.1} parent=5 // pred_region
        %s251 = ssub.s32 %s17, 1
        // Predicated region
        $region13: #{_forward_impl.1} parent=11 // pred_check
          %p252 = pneg %p64
        $region14: #{_forward_impl.1} parent=11 // pred_check_branch
          %254 = sbr.rel (%p252) target = $region16
        $region15: #{_forward_impl.1} parent=11 // pred_region
          _
        $region16: #{_forward_impl.1} parent=11 // pred_fallthru
          _
        // Predicated region
        $region17: #{_forward_impl.1} parent=11 // pred_check
          %p255 = pneg %p85
        $region18: #{_forward_impl.1} parent=11 // pred_check_branch
          %257 = sbr.rel (%p255) target = $region20
        $region19: #{_forward_impl.1} parent=11 // pred_region
          _
        $region20: #{_forward_impl.1} parent=11 // pred_fallthru
          _
        // Predicated region
        $region21: #{_forward_impl.1} parent=11 // pred_check
          %p258 = pneg %p106
        $region22: #{_forward_impl.1} parent=11 // pred_check_branch
          %260 = sbr.rel (%p258) target = $region24
        $region23: #{_forward_impl.1} parent=11 // pred_region
          _
        $region24: #{_forward_impl.1} parent=11 // pred_fallthru
          _
        // Predicated region
        $region25: #{_forward_impl.1} parent=11 // pred_check
          %p261 = pneg %p127
        $region26: #{_forward_impl.1} parent=11 // pred_check_branch
          %263 = sbr.rel (%p261) target = $region28
        $region27: #{_forward_impl.1} parent=11 // pred_region
          _
        $region28: #{_forward_impl.1} parent=11 // pred_fallthru
          _
        // Predicated region
        $region29: #{_forward_impl.1} parent=11 // pred_check
          %p264 = pneg %p148
        $region30: #{_forward_impl.1} parent=11 // pred_check_branch
          %266 = sbr.rel (%p264) target = $region32
        $region31: #{_forward_impl.1} parent=11 // pred_region
          %s268 = ssub.s32 1024, 1024
          %269 = vsyncadd [#allocation3], %s268
          %s270 = sshll.u32 [#allocation2], 4
          %s271 = int_to_ptr.vmem [resolvable:$true] %s270
          %276 = dma.hbm_to_vmem [thread:$0]  %s5, 1024, %s271, [#allocation3], 64, 64, 4
        $region32: #{_forward_impl.1} parent=11 // pred_fallthru
          _
        // Predicated region
        $region33: #{_forward_impl.1} parent=11 // pred_check
          %p277 = pneg %p169
        $region34: #{_forward_impl.1} parent=11 // pred_check_branch
          %279 = sbr.rel (%p277) target = $region36
        $region35: #{_forward_impl.1} parent=11 // pred_region
          _
        $region36: #{_forward_impl.1} parent=11 // pred_fallthru
          _
        // Predicated region
        $region37: #{_forward_impl.1} parent=11 // pred_check
          %p280 = pneg %p190
        $region38: #{_forward_impl.1} parent=11 // pred_check_branch
          %282 = sbr.rel (%p280) target = $region40
        $region39: #{_forward_impl.1} parent=11 // pred_region
          %s284 = ssub.s32 1024, 1024
          %285 = vsyncadd [#allocation5], %s284
          %s286 = sshll.u32 [#allocation4], 4
          %s287 = int_to_ptr.vmem [resolvable:$true] %s286
          %292 = dma.hbm_to_vmem [thread:$0]  %s7, 1024, %s287, [#allocation5], 64, 64, 4
        $region40: #{_forward_impl.1} parent=11 // pred_fallthru
          _
        // Predicated region
        $region41: #{_forward_impl.1} parent=11 // pred_check
          %p293 = pneg %p211
        $region42: #{_forward_impl.1} parent=11 // pred_check_branch
          %295 = sbr.rel (%p293) target = $region44
        $region43: #{_forward_impl.1} parent=11 // pred_region
          _
        $region44: #{_forward_impl.1} parent=11 // pred_fallthru
          _
      $region12: #{_forward_impl.1} parent=5 // pred_fallthru
        _
      %p296 = scmp.lt.s32.totalorder %s17, 2
      // Predicated region
      $region45: #{_forward_impl.1} parent=5 // pred_check
        %p297 = pneg %p296
      $region46: #{_forward_impl.1} parent=5 // pred_check_branch
        %299 = sbr.rel (%p297) target = $region48
      $region47: #{_forward_impl.1} parent=5 // pred_region
        // Predicated region
        $region49: #{_forward_impl.1} parent=47 // pred_check
          %p300 = pneg %p37
        $region50: #{_forward_impl.1} parent=47 // pred_check_branch
          %302 = sbr.rel (%p300) target = $region52
        $region51: #{_forward_impl.1} parent=47 // pred_region
          %s303 = smul.u32 4, %s17
          %p304 = scmp.lt.s32.totalorder %s303, 7
          %s305 = scalar_select %p304, %s303, 7
          %s306 = smul.addr %s305, 4
          %s307 = scalar_lea.vmem %s0, %s306
          %s308 = smul.u32 4, %s17
        $region52: #{_forward_impl.1} parent=47 // pred_fallthru
          _
      $region48: #{_forward_impl.1} parent=5 // pred_fallthru
        _
      %p309 = scmp.le.s32.totalorder 1, %s17
      %p310 = scmp.lt.s32.totalorder %s17, 3
      %p311 = pnand %p309, %p310
      %p312 = pneg %p311
      // Predicated region
      $region53: #{_forward_impl.1} parent=5 // pred_check
        _
      $region54: #{_forward_impl.1} parent=5 // pred_check_branch
        %314 = sbr.rel (%p311) target = $region56
      $region55: #{_forward_impl.1} parent=5 // pred_region
        %s315 = ssub.s32 %s17, 1
        // Predicated region
        $region57: #{_forward_impl.1} parent=55 // pred_check
          %p316 = pneg %p148
        $region58: #{_forward_impl.1} parent=55 // pred_check_branch
          %318 = sbr.rel (%p316) target = $region60
        $region59: #{_forward_impl.1} parent=55 // pred_region
          %319 = dma.done [#allocation3], 1024
        $region60: #{_forward_impl.1} parent=55 // pred_fallthru
          _
        // Predicated region
        $region61: #{_forward_impl.1} parent=55 // pred_check
          %p320 = pneg %p190
        $region62: #{_forward_impl.1} parent=55 // pred_check_branch
          %322 = sbr.rel (%p320) target = $region64
        $region63: #{_forward_impl.1} parent=55 // pred_region
          %323 = dma.done [#allocation5], 1024
        $region64: #{_forward_impl.1} parent=55 // pred_fallthru
          _
        %s324 = smul.u32 4, %s22
        %p325 = scmp.lt.s32.totalorder %s324, 7
        %s326 = scalar_select %p325, %s324, 7
        %s327 = smul.addr %s326, 4
        %s328 = scalar_lea.vmem %s0, %s327
        %p329 = pneg %p43
        %p330 = pneg %p40
        %p331 = pneg %p64
        %p332 = pneg %p61
        %p333 = pneg %p85
        %p334 = pneg %p82
        %p335 = pneg %p106
        %p336 = pneg %p103
        %p337 = pneg %p127
        %p338 = pneg %p124
        %p339 = pneg %p148
        %p340 = pneg %p145
        %p341 = pneg %p169
        %p342 = pneg %p166
        %p343 = pneg %p190
        %p344 = pneg %p187
        %p345 = pneg %p211
        %p346 = pneg %p208
        %p347 = pneg %p237
        %p348 = pneg %p234
        %s349 = smul.u32 4, %s22
        %p350 = scmp.lt.s32.totalorder %s349, 7
        %s351 = scalar_select %p350, %s349, 7
        %s352 = smul.addr %s351, 4
        %s353 = scalar_lea.vmem %s9, %s352
        %s354 = smul.u32 4, %s22
        %p355 = scmp.lt.s32.totalorder %s354, 7
        %s356 = scalar_select %p355, %s354, 7
        %s357 = smul.addr %s356, 4
        %s358 = scalar_lea.vmem %s0, %s357
        %s359 = smul.u32 4, %s22
        %s360 = smul.u32 4, %s22
        %p361 = scmp.lt.s32.totalorder %s360, 7
        %s362 = scalar_select %p361, %s360, 7
        %s363 = smul.addr %s362, 4
        %s364 = scalar_lea.vmem %s9, %s363
        %s365 = smul.u32 4, %s22
        %v367 = vld [vmem:[%s358] sm:$0xf]
        %v368 = vld [vmem:[%s358 + $0x4] sm:$0xf]
        %v369 = vld [vmem:[%s358 + $0x8] sm:$0xf]
        %v370 = vld [vmem:[%s358 + $0xc] sm:$0xf]
        %v371 = vld [vmem:[%s1] sm:$0xf]
        %v372 = vld [vmem:[%s1 + $0x4] sm:$0xf]
        %v373 = vld [vmem:[%s1 + $0x8] sm:$0xf]
        %v374 = vld [vmem:[%s1 + $0xc] sm:$0xf]
        %v375 = vld [vmem:[%s1 + $0x10] sm:$0xf]
        %v376 = vld [vmem:[%s1 + $0x14] sm:$0xf]
        %v377 = vld [vmem:[%s1 + $0x18] sm:$0xf]
        %v378 = vld [vmem:[%s1 + $0x1c] sm:$0xf]
        %v379 = vld [vmem:[%s1 + $0x20] sm:$0xf]
        %v380 = vld [vmem:[%s1 + $0x24] sm:$0xf]
        %v381 = vld [vmem:[%s1 + $0x28] sm:$0xf]
        %v382 = vld [vmem:[%s1 + $0x2c] sm:$0xf]
        %v383 = vld [vmem:[%s1 + $0x30] sm:$0xf]
        %v384 = vld [vmem:[%s1 + $0x34] sm:$0xf]
        %v385 = vld [vmem:[%s1 + $0x38] sm:$0xf]
        %v386 = vld [vmem:[%s1 + $0x3c] sm:$0xf]
        %v387 = vld [vmem:[%s2] sm:$0x1]
        %v389 = vlaneseq
        %v390 = vshrl.u32 %v389, 7
        %v391 = vsub.s32 0, %v390
        %v392 = vrot.slane %v387, %v391
        %v398 = vunpack.c.l.b16 %v367
        %v399 = vunpack.c.l.b16 %v368
        %v400 = vunpack.c.l.b16 %v369
        %v401 = vunpack.c.l.b16 %v370
        %v402 = vpack.c.b16 %v399, %v398
        %v403 = vpack.c.b16 %v401, %v400
        %v422 = vunpack.c.l.b16 %v371
        %v423 = vunpack.c.l.b16 %v372
        %v424 = vunpack.c.l.b16 %v373
        %v425 = vunpack.c.l.b16 %v374
        %v426 = vunpack.c.l.b16 %v375
        %v427 = vunpack.c.l.b16 %v376
        %v428 = vunpack.c.l.b16 %v377
        %v429 = vunpack.c.l.b16 %v378
        %v430 = vunpack.c.l.b16 %v379
        %v431 = vunpack.c.l.b16 %v380
        %v432 = vunpack.c.l.b16 %v381
        %v433 = vunpack.c.l.b16 %v382
        %v434 = vunpack.c.l.b16 %v383
        %v435 = vunpack.c.l.b16 %v384
        %v436 = vunpack.c.l.b16 %v385
        %v437 = vunpack.c.l.b16 %v386
        %v438 = vpack.c.b16 %v423, %v422
        %v439 = vpack.c.b16 %v425, %v424
        %v440 = vpack.c.b16 %v427, %v426
        %v441 = vpack.c.b16 %v429, %v428
        %v442 = vpack.c.b16 %v431, %v430
        %v443 = vpack.c.b16 %v433, %v432
        %v444 = vpack.c.b16 %v435, %v434
        %v445 = vpack.c.b16 %v437, %v436
        %454 = vmatprep.subr.bf16.mxu0 0
        %455 = vmatpush1.bf16.msra.mxu0 %v438
        %456 = vmatprep.subr.bf16.mxu0 0
        %457 = vmatpush1.bf16.msra.mxu0 %v439
        %458 = vmatprep.subr.bf16.mxu0 0
        %459 = vmatpush1.bf16.msra.mxu0 %v440
        %460 = vmatprep.subr.bf16.mxu0 0
        %461 = vmatpush1.bf16.msra.mxu0 %v441
        %462 = vmatprep.subr.bf16.mxu0 0
        %463 = vmatpush1.bf16.msra.mxu0 %v442
        %464 = vmatprep.subr.bf16.mxu0 0
        %465 = vmatpush1.bf16.msra.mxu0 %v443
        %466 = vmatprep.subr.bf16.mxu0 0
        %467 = vmatpush1.bf16.msra.mxu0 %v444
        %468 = vmatprep.subr.bf16.mxu0 0
        %469 = vmatpush1.bf16.msra.mxu0 %v445
        %470 = vmatprep.subr.bf16.mxu0 0
        %471 = vmatpush1.bf16.msra.mxu0 0
        %472 = vmatprep.subr.bf16.mxu0 0
        %473 = vmatpush1.bf16.msra.mxu0 0
        %474 = vmatprep.subr.bf16.mxu0 0
        %475 = vmatpush1.bf16.msra.mxu0 0
        %476 = vmatprep.subr.bf16.mxu0 0
        %477 = vmatpush1.bf16.msra.mxu0 0
        %478 = vmatprep.subr.bf16.mxu0 0
        %479 = vmatpush1.bf16.msra.mxu0 0
        %480 = vmatprep.subr.bf16.mxu0 0
        %481 = vmatpush1.bf16.msra.mxu0 0
        %482 = vmatprep.subr.bf16.mxu0 0
        %483 = vmatpush1.bf16.msra.mxu0 0
        %484 = vmatprep.subr.bf16.mxu0 0
        %485 = vmatpush1.bf16.msra.mxu0 0
        %486 = vmatprep.mubr.bf16.mxu0 0
        %487 = vmatmul.mubr.bf16.gmra.mrb[0].mxu0 %v402
        %v488 = vpop.f32.mrb[0].mxu0
        %v489 = vadd.f32 %v392, %v488
        %v490 = vpop.f32.mrb[0].mxu0
        %v491 = vpop.f32.mrb[0].mxu0
        %v492 = vadd.f32 %v392, %v491
        %v493 = vpop.f32.mrb[0].mxu0
        %494 = vmatprep.mubr.bf16.mxu0 0
        %495 = vmatmul.mubr.bf16.gmra.mrb[0].mxu0 %v403
        %v496 = vpop.f32.mrb[0].mxu0
        %v497 = vadd.f32 %v392, %v496
        %v498 = vpop.f32.mrb[0].mxu0
        %v499 = vpop.f32.mrb[0].mxu0
        %v500 = vadd.f32 %v392, %v499
        %v501 = vpop.f32.mrb[0].mxu0
        %502 = vdwg.mxu0
        %v503 = vmax.f32 %v489, 0.0
        %v504 = vmax.f32 %v492, 0.0
        %v505 = vmax.f32 %v497, 0.0
        %v506 = vmax.f32 %v500, 0.0
        %v507 = vpack.c.bf16 %v504, %v503
        %v508 = vpack.c.bf16 %v506, %v505
        %v509 = vld [vmem:[%s3] sm:$0xf]
        %v510 = vld [vmem:[%s3 + $0x4] sm:$0xf]
        %v511 = vld [vmem:[%s3 + $0x8] sm:$0xf]
        %v512 = vld [vmem:[%s3 + $0xc] sm:$0xf]
        %v513 = vld [vmem:[%s3 + $0x10] sm:$0xf]
        %v514 = vld [vmem:[%s3 + $0x14] sm:$0xf]
        %v515 = vld [vmem:[%s3 + $0x18] sm:$0xf]
        %v516 = vld [vmem:[%s3 + $0x1c] sm:$0xf]
        %v517 = vld [vmem:[%s3 + $0x20] sm:$0xf]
        %v518 = vld [vmem:[%s3 + $0x24] sm:$0xf]
        %v519 = vld [vmem:[%s3 + $0x28] sm:$0xf]
        %v520 = vld [vmem:[%s3 + $0x2c] sm:$0xf]
        %v521 = vld [vmem:[%s3 + $0x30] sm:$0xf]
        %v522 = vld [vmem:[%s3 + $0x34] sm:$0xf]
        %v523 = vld [vmem:[%s3 + $0x38] sm:$0xf]
        %v524 = vld [vmem:[%s3 + $0x3c] sm:$0xf]
        %v525 = vld [vmem:[%s4] sm:$0x1]
        %v527 = vlaneseq
        %v528 = vshrl.u32 %v527, 7
        %v529 = vsub.s32 0, %v528
        %v530 = vrot.slane %v525, %v529
        %v548 = vunpack.c.l.b16 %v509
        %v549 = vunpack.c.l.b16 %v510
        %v550 = vunpack.c.l.b16 %v511
        %v551 = vunpack.c.l.b16 %v512
        %v552 = vunpack.c.l.b16 %v513
        %v553 = vunpack.c.l.b16 %v514
        %v554 = vunpack.c.l.b16 %v515
        %v555 = vunpack.c.l.b16 %v516
        %v556 = vunpack.c.l.b16 %v517
        %v557 = vunpack.c.l.b16 %v518
        %v558 = vunpack.c.l.b16 %v519
        %v559 = vunpack.c.l.b16 %v520
        %v560 = vunpack.c.l.b16 %v521
        %v561 = vunpack.c.l.b16 %v522
        %v562 = vunpack.c.l.b16 %v523
        %v563 = vunpack.c.l.b16 %v524
        %v564 = vpack.c.b16 %v549, %v548
        %v565 = vpack.c.b16 %v551, %v550
        %v566 = vpack.c.b16 %v553, %v552
        %v567 = vpack.c.b16 %v555, %v554
        %v568 = vpack.c.b16 %v557, %v556
        %v569 = vpack.c.b16 %v559, %v558
        %v570 = vpack.c.b16 %v561, %v560
        %v571 = vpack.c.b16 %v563, %v562
        %580 = vmatprep.subr.bf16.mxu0 0
        %581 = vmatpush1.bf16.msra.mxu0 %v564
        %582 = vmatprep.subr.bf16.mxu0 0
        %583 = vmatpush1.bf16.msra.mxu0 %v565
        %584 = vmatprep.subr.bf16.mxu0 0
        %585 = vmatpush1.bf16.msra.mxu0 %v566
        %586 = vmatprep.subr.bf16.mxu0 0
        %587 = vmatpush1.bf16.msra.mxu0 %v567
        %588 = vmatprep.subr.bf16.mxu0 0
        %589 = vmatpush1.bf16.msra.mxu0 %v568
        %590 = vmatprep.subr.bf16.mxu0 0
        %591 = vmatpush1.bf16.msra.mxu0 %v569
        %592 = vmatprep.subr.bf16.mxu0 0
        %593 = vmatpush1.bf16.msra.mxu0 %v570
        %594 = vmatprep.subr.bf16.mxu0 0
        %595 = vmatpush1.bf16.msra.mxu0 %v571
        %596 = vmatprep.subr.bf16.mxu0 0
        %597 = vmatpush1.bf16.msra.mxu0 0
        %598 = vmatprep.subr.bf16.mxu0 0
        %599 = vmatpush1.bf16.msra.mxu0 0
        %600 = vmatprep.subr.bf16.mxu0 0
        %601 = vmatpush1.bf16.msra.mxu0 0
        %602 = vmatprep.subr.bf16.mxu0 0
        %603 = vmatpush1.bf16.msra.mxu0 0
        %604 = vmatprep.subr.bf16.mxu0 0
        %605 = vmatpush1.bf16.msra.mxu0 0
        %606 = vmatprep.subr.bf16.mxu0 0
        %607 = vmatpush1.bf16.msra.mxu0 0
        %608 = vmatprep.subr.bf16.mxu0 0
        %609 = vmatpush1.bf16.msra.mxu0 0
        %610 = vmatprep.subr.bf16.mxu0 0
        %611 = vmatpush1.bf16.msra.mxu0 0
        %612 = vmatprep.mubr.bf16.mxu0 0
        %613 = vmatmul.mubr.bf16.gmra.mrb[0].mxu0 %v507
        %v614 = vpop.f32.mrb[0].mxu0
        %v615 = vadd.f32 %v530, %v614
        %v616 = vpop.f32.mrb[0].mxu0
        %v617 = vpop.f32.mrb[0].mxu0
        %v618 = vadd.f32 %v530, %v617
        %v619 = vpop.f32.mrb[0].mxu0
        %620 = vmatprep.mubr.bf16.mxu0 0
        %621 = vmatmul.mubr.bf16.gmra.mrb[0].mxu0 %v508
        %v622 = vpop.f32.mrb[0].mxu0
        %v623 = vadd.f32 %v530, %v622
        %v624 = vpop.f32.mrb[0].mxu0
        %v625 = vpop.f32.mrb[0].mxu0
        %v626 = vadd.f32 %v530, %v625
        %v627 = vpop.f32.mrb[0].mxu0
        %628 = vdwg.mxu0
        %v629 = vpack.c.bf16 %v618, %v615
        %v630 = vpack.c.bf16 %v626, %v623
        %v631 = vld [vmem:[#allocation2] sm:$0xf]
        %v632 = vld [vmem:[#allocation2 + $0x4] sm:$0xf]
        %v633 = vld [vmem:[#allocation2 + $0x8] sm:$0xf]
        %v634 = vld [vmem:[#allocation2 + $0xc] sm:$0xf]
        %v635 = vld [vmem:[#allocation2 + $0x10] sm:$0xf]
        %v636 = vld [vmem:[#allocation2 + $0x14] sm:$0xf]
        %v637 = vld [vmem:[#allocation2 + $0x18] sm:$0xf]
        %v638 = vld [vmem:[#allocation2 + $0x1c] sm:$0xf]
        %v639 = vld [vmem:[#allocation2 + $0x20] sm:$0xf]
        %v640 = vld [vmem:[#allocation2 + $0x24] sm:$0xf]
        %v641 = vld [vmem:[#allocation2 + $0x28] sm:$0xf]
        %v642 = vld [vmem:[#allocation2 + $0x2c] sm:$0xf]
        %v643 = vld [vmem:[#allocation2 + $0x30] sm:$0xf]
        %v644 = vld [vmem:[#allocation2 + $0x34] sm:$0xf]
        %v645 = vld [vmem:[#allocation2 + $0x38] sm:$0xf]
        %v646 = vld [vmem:[#allocation2 + $0x3c] sm:$0xf]
        %v647 = vld [vmem:[%s6] sm:$0x1]
        %v649 = vlaneseq
        %v650 = vshrl.u32 %v649, 7
        %v651 = vsub.s32 0, %v650
        %v652 = vrot.slane %v647, %v651
        %v670 = vunpack.c.l.b16 %v631
        %v671 = vunpack.c.l.b16 %v632
        %v672 = vunpack.c.l.b16 %v633
        %v673 = vunpack.c.l.b16 %v634
        %v674 = vunpack.c.l.b16 %v635
        %v675 = vunpack.c.l.b16 %v636
        %v676 = vunpack.c.l.b16 %v637
        %v677 = vunpack.c.l.b16 %v638
        %v678 = vunpack.c.l.b16 %v639
        %v679 = vunpack.c.l.b16 %v640
        %v680 = vunpack.c.l.b16 %v641
        %v681 = vunpack.c.l.b16 %v642
        %v682 = vunpack.c.l.b16 %v643
        %v683 = vunpack.c.l.b16 %v644
        %v684 = vunpack.c.l.b16 %v645
        %v685 = vunpack.c.l.b16 %v646
        %v686 = vpack.c.b16 %v671, %v670
        %v687 = vpack.c.b16 %v673, %v672
        %v688 = vpack.c.b16 %v675, %v674
        %v689 = vpack.c.b16 %v677, %v676
        %v690 = vpack.c.b16 %v679, %v678
        %v691 = vpack.c.b16 %v681, %v680
        %v692 = vpack.c.b16 %v683, %v682
        %v693 = vpack.c.b16 %v685, %v684
        %702 = vmatprep.subr.bf16.mxu0 0
        %703 = vmatpush1.bf16.msra.mxu0 %v686
        %704 = vmatprep.subr.bf16.mxu0 0
        %705 = vmatpush1.bf16.msra.mxu0 %v687
        %706 = vmatprep.subr.bf16.mxu0 0
        %707 = vmatpush1.bf16.msra.mxu0 %v688
        %708 = vmatprep.subr.bf16.mxu0 0
        %709 = vmatpush1.bf16.msra.mxu0 %v689
        %710 = vmatprep.subr.bf16.mxu0 0
        %711 = vmatpush1.bf16.msra.mxu0 %v690
        %712 = vmatprep.subr.bf16.mxu0 0
        %713 = vmatpush1.bf16.msra.mxu0 %v691
        %714 = vmatprep.subr.bf16.mxu0 0
        %715 = vmatpush1.bf16.msra.mxu0 %v692
        %716 = vmatprep.subr.bf16.mxu0 0
        %717 = vmatpush1.bf16.msra.mxu0 %v693
        %718 = vmatprep.subr.bf16.mxu0 0
        %719 = vmatpush1.bf16.msra.mxu0 0
        %720 = vmatprep.subr.bf16.mxu0 0
        %721 = vmatpush1.bf16.msra.mxu0 0
        %722 = vmatprep.subr.bf16.mxu0 0
        %723 = vmatpush1.bf16.msra.mxu0 0
        %724 = vmatprep.subr.bf16.mxu0 0
        %725 = vmatpush1.bf16.msra.mxu0 0
        %726 = vmatprep.subr.bf16.mxu0 0
        %727 = vmatpush1.bf16.msra.mxu0 0
        %728 = vmatprep.subr.bf16.mxu0 0
        %729 = vmatpush1.bf16.msra.mxu0 0
        %730 = vmatprep.subr.bf16.mxu0 0
        %731 = vmatpush1.bf16.msra.mxu0 0
        %732 = vmatprep.subr.bf16.mxu0 0
        %733 = vmatpush1.bf16.msra.mxu0 0
        %734 = vmatprep.mubr.bf16.mxu0 0
        %735 = vmatmul.mubr.bf16.gmra.mrb[0].mxu0 %v629
        %v736 = vpop.f32.mrb[0].mxu0
        %v737 = vadd.f32 %v652, %v736
        %v738 = vpop.f32.mrb[0].mxu0
        %v739 = vpop.f32.mrb[0].mxu0
        %v740 = vadd.f32 %v652, %v739
        %v741 = vpop.f32.mrb[0].mxu0
        %742 = vmatprep.mubr.bf16.mxu0 0
        %743 = vmatmul.mubr.bf16.gmra.mrb[0].mxu0 %v630
        %v744 = vpop.f32.mrb[0].mxu0
        %v745 = vadd.f32 %v652, %v744
        %v746 = vpop.f32.mrb[0].mxu0
        %v747 = vpop.f32.mrb[0].mxu0
        %v748 = vadd.f32 %v652, %v747
        %v749 = vpop.f32.mrb[0].mxu0
        %750 = vdwg.mxu0
        %v751 = vmax.f32 %v737, 0.0
        %v752 = vmax.f32 %v740, 0.0
        %v753 = vmax.f32 %v745, 0.0
        %v754 = vmax.f32 %v748, 0.0
        %v755 = vpack.c.bf16 %v752, %v751
        %v756 = vpack.c.bf16 %v754, %v753
        %v757 = vld [vmem:[#allocation4] sm:$0xf]
        %v758 = vld [vmem:[#allocation4 + $0x4] sm:$0xf]
        %v759 = vld [vmem:[#allocation4 + $0x8] sm:$0xf]
        %v760 = vld [vmem:[#allocation4 + $0xc] sm:$0xf]
        %v761 = vld [vmem:[#allocation4 + $0x10] sm:$0xf]
        %v762 = vld [vmem:[#allocation4 + $0x14] sm:$0xf]
        %v763 = vld [vmem:[#allocation4 + $0x18] sm:$0xf]
        %v764 = vld [vmem:[#allocation4 + $0x1c] sm:$0xf]
        %v765 = vld [vmem:[#allocation4 + $0x20] sm:$0xf]
        %v766 = vld [vmem:[#allocation4 + $0x24] sm:$0xf]
        %v767 = vld [vmem:[#allocation4 + $0x28] sm:$0xf]
        %v768 = vld [vmem:[#allocation4 + $0x2c] sm:$0xf]
        %v769 = vld [vmem:[#allocation4 + $0x30] sm:$0xf]
        %v770 = vld [vmem:[#allocation4 + $0x34] sm:$0xf]
        %v771 = vld [vmem:[#allocation4 + $0x38] sm:$0xf]
        %v772 = vld [vmem:[#allocation4 + $0x3c] sm:$0xf]
        %v773 = vld [vmem:[%s8] sm:$0x1]
        %v775 = vlaneseq
        %v776 = vshrl.u32 %v775, 7
        %v777 = vsub.s32 0, %v776
        %v778 = vrot.slane %v773, %v777
        %v796 = vunpack.c.l.b16 %v757
        %v797 = vunpack.c.l.b16 %v758
        %v798 = vunpack.c.l.b16 %v759
        %v799 = vunpack.c.l.b16 %v760
        %v800 = vunpack.c.l.b16 %v761
        %v801 = vunpack.c.l.b16 %v762
        %v802 = vunpack.c.l.b16 %v763
        %v803 = vunpack.c.l.b16 %v764
        %v804 = vunpack.c.l.b16 %v765
        %v805 = vunpack.c.l.b16 %v766
        %v806 = vunpack.c.l.b16 %v767
        %v807 = vunpack.c.l.b16 %v768
        %v808 = vunpack.c.l.b16 %v769
        %v809 = vunpack.c.l.b16 %v770
        %v810 = vunpack.c.l.b16 %v771
        %v811 = vunpack.c.l.b16 %v772
        %v812 = vpack.c.b16 %v797, %v796
        %v813 = vpack.c.b16 %v799, %v798
        %v814 = vpack.c.b16 %v801, %v800
        %v815 = vpack.c.b16 %v803, %v802
        %v816 = vpack.c.b16 %v805, %v804
        %v817 = vpack.c.b16 %v807, %v806
        %v818 = vpack.c.b16 %v809, %v808
        %v819 = vpack.c.b16 %v811, %v810
        %828 = vmatprep.subr.bf16.mxu0 0
        %829 = vmatpush1.bf16.msra.mxu0 %v812
        %830 = vmatprep.subr.bf16.mxu0 0
        %831 = vmatpush1.bf16.msra.mxu0 %v813
        %832 = vmatprep.subr.bf16.mxu0 0
        %833 = vmatpush1.bf16.msra.mxu0 %v814
        %834 = vmatprep.subr.bf16.mxu0 0
        %835 = vmatpush1.bf16.msra.mxu0 %v815
        %836 = vmatprep.subr.bf16.mxu0 0
        %837 = vmatpush1.bf16.msra.mxu0 %v816
        %838 = vmatprep.subr.bf16.mxu0 0
        %839 = vmatpush1.bf16.msra.mxu0 %v817
        %840 = vmatprep.subr.bf16.mxu0 0
        %841 = vmatpush1.bf16.msra.mxu0 %v818
        %842 = vmatprep.subr.bf16.mxu0 0
        %843 = vmatpush1.bf16.msra.mxu0 %v819
        %844 = vmatprep.subr.bf16.mxu0 0
        %845 = vmatpush1.bf16.msra.mxu0 0
        %846 = vmatprep.subr.bf16.mxu0 0
        %847 = vmatpush1.bf16.msra.mxu0 0
        %848 = vmatprep.subr.bf16.mxu0 0
        %849 = vmatpush1.bf16.msra.mxu0 0
        %850 = vmatprep.subr.bf16.mxu0 0
        %851 = vmatpush1.bf16.msra.mxu0 0
        %852 = vmatprep.subr.bf16.mxu0 0
        %853 = vmatpush1.bf16.msra.mxu0 0
        %854 = vmatprep.subr.bf16.mxu0 0
        %855 = vmatpush1.bf16.msra.mxu0 0
        %856 = vmatprep.subr.bf16.mxu0 0
        %857 = vmatpush1.bf16.msra.mxu0 0
        %858 = vmatprep.subr.bf16.mxu0 0
        %859 = vmatpush1.bf16.msra.mxu0 0
        %860 = vmatprep.mubr.bf16.mxu0 0
        %861 = vmatmul.mubr.bf16.gmra.mrb[0].mxu0 %v755
        %v862 = vpop.f32.mrb[0].mxu0
        %v863 = vadd.f32 %v778, %v862
        %v864 = vpop.f32.mrb[0].mxu0
        %v865 = vpop.f32.mrb[0].mxu0
        %v866 = vadd.f32 %v778, %v865
        %v867 = vpop.f32.mrb[0].mxu0
        %868 = vmatprep.mubr.bf16.mxu0 0
        %869 = vmatmul.mubr.bf16.gmra.mrb[0].mxu0 %v756
        %v870 = vpop.f32.mrb[0].mxu0
        %v871 = vadd.f32 %v778, %v870
        %v872 = vpop.f32.mrb[0].mxu0
        %v873 = vpop.f32.mrb[0].mxu0
        %v874 = vadd.f32 %v778, %v873
        %v875 = vpop.f32.mrb[0].mxu0
        %876 = vdwg.mxu0
        %v877 = vpack.c.bf16 %v866, %v863
        %v878 = vpack.c.bf16 %v874, %v871
        %v881 = vunpack.c.l.b16 %v877
        %v882 = vunpack.c.h.b16 %v877
        %v883 = vunpack.c.l.b16 %v878
        %v884 = vunpack.c.h.b16 %v878
        %v885 = vpack.c.b16 %v881, %v881
        %v886 = vpack.c.b16 %v882, %v882
        %v887 = vpack.c.b16 %v883, %v883
        %v888 = vpack.c.b16 %v884, %v884
        %893 = vst [vmem:[%s364] sm:$0xf] %v885
        %894 = vst [vmem:[%s364 + $0x4] sm:$0xf] %v886
        %895 = vst [vmem:[%s364 + $0x8] sm:$0xf] %v887
        %896 = vst [vmem:[%s364 + $0xc] sm:$0xf] %v888
        %s897 = smul.u32 4, %s22
        %p898 = scmp.lt.s32.totalorder %s897, 7
        %s899 = scalar_select %p898, %s897, 7
        %s900 = smul.addr %s899, 4
        %s901 = scalar_lea.vmem %s9, %s900
        // Predicated region
        $region65: #{_forward_impl.1} parent=55 // pred_check
          %p902 = pneg %p234
        $region66: #{_forward_impl.1} parent=55 // pred_check_branch
          %904 = sbr.rel (%p902) target = $region68
        $region67: #{_forward_impl.1} parent=55 // pred_region
          %s905 = smul.u32 4, %s22
        $region68: #{_forward_impl.1} parent=55 // pred_fallthru
          _
      $region56: #{_forward_impl.1} parent=5 // pred_fallthru
        _
      %p906 = scmp.le.s32.totalorder 2, %s17
      // Predicated region
      $region69: #{_forward_impl.1} parent=5 // pred_check
        %p907 = pneg %p906
      $region70: #{_forward_impl.1} parent=5 // pred_check_branch
        %909 = sbr.rel (%p907) target = $region72
      $region71: #{_forward_impl.1} parent=5 // pred_region
        %s910 = ssub.s32 %s17, 2
        // Predicated region
        $region73: #{_forward_impl.1} parent=71 // pred_check
          %p911 = pneg %p240
        $region74: #{_forward_impl.1} parent=71 // pred_check_branch
          %913 = sbr.rel (%p911) target = $region76
        $region75: #{_forward_impl.1} parent=71 // pred_region
          %s914 = smul.u32 4, %s23
          %p915 = scmp.lt.s32.totalorder %s914, 7
          %s916 = scalar_select %p915, %s914, 7
          %s917 = smul.addr %s916, 4
          %s918 = scalar_lea.vmem %s9, %s917
        $region76: #{_forward_impl.1} parent=71 // pred_fallthru
          _
      $region72: #{_forward_impl.1} parent=5 // pred_fallthru
        _
    $region6: #{_forward_impl.1} parent=1 // loop_footer
      %s21 = sadd.s32 1, %s17
    $region7: #{_forward_impl.1} parent=1 // loop_footer_branch
      %16 = sbr.rel target = $region3
    $region8: #{_forward_impl.1} parent=1 // loop_exit
      _
    %919 = vsyncpa [#allocation3], 1
    %s920 = scalar_lea.sflag [#allocation3], 1
    %921 = vsyncpa %s920, 1
    %922 = vsyncpa [#allocation5], 1

</llo_original>
